<compile_context>
chip_gen: v7x
topology: tpu7x:2x2x1
jax: 0.10.0
libtpu: 0.0.40
codegen_flags: <defaults>
</compile_context>

<pallas_src>
import functools

import jax
import jax.numpy as jnp
from jax.experimental import pallas as pl
from jax.experimental.pallas import tpu as pltpu


def _round_up(n, m):
    return (n + m - 1) // m * m


def _lstm_kernel(gx_ref, whh_ref, wfc_ref, bfc_ref, out_ref, h_sc, c_sc, *,
                 hp, t_blk, seq_len, masked):
    """Grid = (batch_tiles [parallel], time_chunks [arbitrary]).

    One grid step consumes a (t_blk, bp_tile, 4*hp) pre-activation block and
    runs the recurrence over it.  h_sc / c_sc persist across the time axis.
    """
    ti = pl.program_id(1)

    @pl.when(ti == 0)
    def _init():
        h_sc[...] = jnp.zeros_like(h_sc)
        c_sc[...] = jnp.zeros_like(c_sc)

    def step(t, carry):
        # Recurrent part: only h @ W_hh per step (bf16 operands, f32 MXU accum).
        gh = jnp.dot(h_sc[...].astype(jnp.bfloat16), whh_ref[...],
                     preferred_element_type=jnp.float32)
        gates = gx_ref[t] + gh                                  # (bp_tile, 4*hp) f32

        # Lane-aligned gate slices (hp is a multiple of 128). PyTorch order i,f,g,o.
        # TODO(synk): for H not a multiple of 128, packing two gates per 128-lane
        # group would cut padded-lane EUP work; kept simple (per-gate padding).
        i_g = jax.nn.sigmoid(gates[:, 0 * hp:1 * hp])
        f_g = jax.nn.sigmoid(gates[:, 1 * hp:2 * hp])
        g_g = jnp.tanh(gates[:, 2 * hp:3 * hp])
        o_g = jax.nn.sigmoid(gates[:, 3 * hp:4 * hp])

        c_new = f_g * c_sc[...] + i_g * g_g
        h_new = o_g * jnp.tanh(c_new)

        if masked:
            # Ragged final chunk: padded timesteps must not update the state.
            valid = (ti * t_blk + t) < seq_len
            h_sc[...] = jnp.where(valid, h_new, h_sc[...])
            c_sc[...] = jnp.where(valid, c_new, c_sc[...])
        else:
            h_sc[...] = h_new
            c_sc[...] = c_new
        return carry

    jax.lax.fori_loop(0, t_blk, step, 0, unroll=min(t_blk, 8))

    # Final Linear layer, applied once per batch tile to the last hidden state.
    @pl.when(ti == pl.num_programs(1) - 1)
    def _finalize():
        y = (jnp.dot(h_sc[...].astype(jnp.bfloat16), wfc_ref[...],
                     preferred_element_type=jnp.float32) + bfc_ref[...])
        out_ref[...] = y.astype(out_ref.dtype)


def init_params(key, input_size, hidden_size):
    """Logical (unpadded, f32) params, PyTorch gate order i,f,g,o, pre-transposed for x @ W."""
    k = 1.0 / jnp.sqrt(jnp.float32(hidden_size))
    ks = jax.random.split(key, 6)
    w_ih = jax.random.uniform(ks[0], (input_size, 4 * hidden_size), jnp.float32, -k, k)
    w_hh = jax.random.uniform(ks[1], (hidden_size, 4 * hidden_size), jnp.float32, -k, k)
    b_ih = jax.random.uniform(ks[2], (1, 4 * hidden_size), jnp.float32, -k, k)
    b_hh = jax.random.uniform(ks[3], (1, 4 * hidden_size), jnp.float32, -k, k)
    w_fc = jax.random.uniform(ks[4], (hidden_size, input_size), jnp.float32, -k, k)
    b_fc = jax.random.uniform(ks[5], (1, input_size), jnp.float32, -k, k)
    return {"w_ih": w_ih, "w_hh": w_hh, "b": b_ih + b_hh, "w_fc": w_fc, "b_fc": b_fc}


def prepare_params(params, lane=128):
    """Zero-pad hidden dim to a lane multiple (per gate block) and cast matmul weights to bf16."""
    h = params["w_hh"].shape[0]
    hp = _round_up(h, lane)

    def pad_gates(w):                       # (..., 4H) -> (..., 4Hp), per gate block
        parts = []
        for k in range(4):
            g = w[..., k * h:(k + 1) * h]
            pad = [(0, 0)] * (w.ndim - 1) + [(0, hp - h)]
            parts.append(jnp.pad(g, pad))
        return jnp.concatenate(parts, axis=-1)

    w_ih = pad_gates(params["w_ih"])                                    # (I, 4Hp)
    w_hh = jnp.pad(pad_gates(params["w_hh"]), ((0, hp - h), (0, 0)))    # (Hp, 4Hp)
    bias = pad_gates(params["b"])                                       # (1, 4Hp)
    w_fc = jnp.pad(params["w_fc"], ((0, hp - h), (0, 0)))               # (Hp, I)
    return {
        "w_ih": w_ih.astype(jnp.bfloat16),
        "w_hh": w_hh.astype(jnp.bfloat16),
        "b": bias.astype(jnp.float32),
        "w_fc": w_fc.astype(jnp.bfloat16),
        "b_fc": params["b_fc"].astype(jnp.float32),
    }


def forecast_lstm_forward(x, kparams, *, t_blk=None):
    """x: (B, S, I) f32, kparams from prepare_params  ->  (B, I) f32."""
    b, s, inp = x.shape
    hp = kparams["w_hh"].shape[0]

    # ---- batch tiling: pad batch to a sublane multiple, tile up to 256 MXU rows ----
    bp_tile = min(_round_up(max(b, 1), 8), 256)
    bp = _round_up(_round_up(max(b, 1), 8), bp_tile)
    n_btiles = bp // bp_tile

    # ---- time chunking: budget the double-buffered f32 pre-activation blocks ----
    if t_blk is None:
        per_t = 2 * bp_tile * 4 * hp * 4                    # 2 gx buffers per timestep
        t_blk = int(max(1, min(s, 64, (8 << 20) // per_t)))
    n_chunks = int(pl.cdiv(s, t_blk))
    s_pad = n_chunks * t_blk
    masked = s_pad != s

    # ---- hoisted input projection: one big XLA MXU matmul, off the recurrent path ----
    xp = x
    if bp != b:
        xp = jnp.zeros((bp, s, inp), x.dtype).at[:b].set(x)
    x_t = jnp.transpose(xp, (1, 0, 2)).astype(jnp.bfloat16)            # (S, Bp, I)
    gx = (jnp.dot(x_t, kparams["w_ih"], preferred_element_type=jnp.float32)
          + kparams["b"])                                              # (S, Bp, 4Hp) f32
    if masked:
        gx = jnp.pad(gx, ((0, s_pad - s), (0, 0), (0, 0)))

    kernel = functools.partial(_lstm_kernel, hp=hp, t_blk=t_blk,
                               seq_len=s, masked=masked)

    grid_spec = pltpu.PrefetchScalarGridSpec(
        num_scalar_prefetch=0,
        grid=(n_btiles, n_chunks),
        in_specs=[
            pl.BlockSpec((t_blk, bp_tile, 4 * hp), lambda bi, ti: (ti, bi, 0)),  # gx chunk (f32)
            pl.BlockSpec((hp, 4 * hp), lambda bi, ti: (0, 0)),   # W_hh^T (bf16, resident)
            pl.BlockSpec((hp, inp), lambda bi, ti: (0, 0)),      # W_fc^T (bf16, resident)
            pl.BlockSpec((1, inp), lambda bi, ti: (0, 0)),       # b_fc   (f32)
        ],
        out_specs=pl.BlockSpec((bp_tile, inp), lambda bi, ti: (bi, 0)),  # resident across time
        scratch_shapes=[
            pltpu.VMEM((bp_tile, hp), jnp.float32),              # h state (per batch tile)
            pltpu.VMEM((bp_tile, hp), jnp.float32),              # c state (per batch tile)
        ],
    )

    # Explicit VMEM budget: double-buffered gx blocks + resident weights + state + out.
    vmem_bytes = (2 * t_blk * bp_tile * 4 * hp * 4
                  + 2 * hp * 4 * hp * 2
                  + 2 * hp * inp * 2 + 2 * inp * 4
                  + 2 * bp_tile * inp * 4
                  + 2 * bp_tile * hp * 4)
    vmem_limit = int(min(max(2 * vmem_bytes, 16 << 20), 64 << 20))

    out = pl.pallas_call(
        kernel,
        out_shape=jax.ShapeDtypeStruct((bp, inp), jnp.float32),
        grid_spec=grid_spec,
        compiler_params=pltpu.CompilerParams(
            dimension_semantics=("parallel", "arbitrary"),   # batch tiles parallel; time serial
            vmem_limit_bytes=vmem_limit,
        ),
    )(gx, kparams["w_hh"], kparams["w_fc"], kparams["b_fc"])
    return out[:b]


def reference_forward(x, params):
    """Pure-JAX reference with the same bf16-operand / f32-accumulate matmuls."""
    B, S, I = x.shape
    H = params["w_hh"].shape[0]
    w_ih = params["w_ih"].astype(jnp.bfloat16)
    w_hh = params["w_hh"].astype(jnp.bfloat16)
    w_fc = params["w_fc"].astype(jnp.bfloat16)
    bias = params["b"][0]

    def step(carry, x_t):
        h, c = carry
        gates = (jnp.dot(x_t.astype(jnp.bfloat16), w_ih, preferred_element_type=jnp.float32)
                 + jnp.dot(h.astype(jnp.bfloat16), w_hh, preferred_element_type=jnp.float32)
                 + bias)
        i = jax.nn.sigmoid(gates[:, 0 * H:1 * H])
        f = jax.nn.sigmoid(gates[:, 1 * H:2 * H])
        g = jnp.tanh(gates[:, 2 * H:3 * H])
        o = jax.nn.sigmoid(gates[:, 3 * H:4 * H])
        c = f * c + i * g
        h = o * jnp.tanh(c)
        return (h, c), None

    init = (jnp.zeros((B, H), jnp.float32), jnp.zeros((B, H), jnp.float32))
    (h_last, _), _ = jax.lax.scan(step, init, jnp.transpose(x, (1, 0, 2)))
    return (jnp.dot(h_last.astype(jnp.bfloat16), w_fc, preferred_element_type=jnp.float32)
            + params["b_fc"][0])


if __name__ == "__main__":
    # Shapes implied by ForecastLSTM(input_size=4, hidden_size=64), batch_first=True.
    B, S, I, H = 2, 8, 4, 64
    key = jax.random.PRNGKey(0)
    k_x, k_p = jax.random.split(key)
    x = jax.random.normal(k_x, (B, S, I), jnp.float32)

    params = init_params(k_p, I, H)          # logical f32 params (reference)
    kparams = prepare_params(params)         # padded + bf16 params (kernel)

    out = jax.block_until_ready(forecast_lstm_forward(x, kparams))
    ref = jax.block_until_ready(reference_forward(x, params))

    assert out.shape == (B, I)
    assert jnp.allclose(out, ref, atol=1e-4, rtol=1e-4), (out, ref)
    print("KERNEL_OK")
</pallas_src>

<mosaic_0001>
module attributes {stable_mosaic.version = 11 : i64} {
  func.func @_lstm_kernel(%arg0: i32, %arg1: i32, %arg2: memref<8x8x512xf32, #tpu.memory_space<vmem>>, %arg3: memref<128x512xbf16, #tpu.memory_space<vmem>>, %arg4: memref<128x4xbf16, #tpu.memory_space<vmem>>, %arg5: memref<1x4xf32, #tpu.memory_space<vmem>>, %arg6: memref<8x4xf32, #tpu.memory_space<vmem>>, %arg7: memref<8x128xf32, #tpu.memory_space<vmem>>, %arg8: memref<8x128xf32, #tpu.memory_space<vmem>>) attributes {dimension_semantics = [#tpu.dimension_semantics<parallel>, #tpu.dimension_semantics<arbitrary>], iteration_bounds = array<i64: 1, 1>, scalar_prefetch = 0 : i64, scratch_operands = 2 : i64, tpu.core_type = #tpu.core_type<tc>, window_params = [{transform_indices = @transform_0, window_bounds = array<i64: 8, 8, 512>}, {pipeline_mode = #tpu.pipeline_mode<synchronous>, transform_indices = @transform_1, window_bounds = array<i64: 128, 512>}, {pipeline_mode = #tpu.pipeline_mode<synchronous>, transform_indices = @transform_2, window_bounds = array<i64: 128, 4>}, {pipeline_mode = #tpu.pipeline_mode<synchronous>, transform_indices = @transform_3, window_bounds = array<i64: 1, 4>}, {transform_indices = @transform_4, window_bounds = array<i64: 8, 4>}]} {
    %c0_i32 = arith.constant 0 : i32
    %0 = arith.cmpi eq, %arg1, %c0_i32 : i32
    %1 = arith.extui %0 : i1 to i32
    %c0_i32_0 = arith.constant 0 : i32
    %2 = arith.cmpi ne, %1, %c0_i32_0 : i32
    scf.if %2 {
      %cst_130 = arith.constant 0.000000e+00 : f32
      %294 = vector.broadcast %cst_130 : f32 to vector<8x128xf32>
      %c0_131 = arith.constant 0 : index
      %c0_132 = arith.constant 0 : index
      %295 = vector.load %arg7[%c0_131, %c0_132] : memref<8x128xf32, #tpu.memory_space<vmem>>, vector<8x128xf32>
      tpu.vector_store %arg7[%c0_131, %c0_132], %294 {strides = array<i32>} : memref<8x128xf32, #tpu.memory_space<vmem>>, vector<8x128xf32>,
      %cst_133 = arith.constant 0.000000e+00 : f32
      %296 = vector.broadcast %cst_133 : f32 to vector<8x128xf32>
      %c0_134 = arith.constant 0 : index
      %c0_135 = arith.constant 0 : index
      %297 = vector.load %arg8[%c0_134, %c0_135] : memref<8x128xf32, #tpu.memory_space<vmem>>, vector<8x128xf32>
      tpu.vector_store %arg8[%c0_134, %c0_135], %296 {strides = array<i32>} : memref<8x128xf32, #tpu.memory_space<vmem>>, vector<8x128xf32>,
    } else {
    }
    %c0_i32_1 = arith.constant 0 : i32
    %c0 = arith.constant 0 : index
    %c0_2 = arith.constant 0 : index
    %3 = vector.load %arg7[%c0, %c0_2] : memref<8x128xf32, #tpu.memory_space<vmem>>, vector<8x128xf32>
    %4 = arith.truncf %3 : vector<8x128xf32> to vector<8x128xbf16>
    %c0_3 = arith.constant 0 : index
    %c0_4 = arith.constant 0 : index
    %5 = vector.load %arg3[%c0_3, %c0_4] : memref<128x512xbf16, #tpu.memory_space<vmem>>, vector<128x512xbf16>
    %cst = arith.constant dense<0.000000e+00> : vector<8x512xf32>
    %6 = tpu.matmul %4, %5, %cst {dimension_numbers = #tpu.dot_dimension_numbers<[1], [0], [0], [1], [0, 0, 1, 1], [], []>} : vector<8x128xbf16>, vector<128x512xbf16>, vector<8x512xf32> -> vector<8x512xf32>
    %7 = arith.index_cast %c0_i32_1 : i32 to index
    %c0_5 = arith.constant 0 : index
    %c0_6 = arith.constant 0 : index
    %8 = vector.load %arg2[%7, %c0_5, %c0_6] : memref<8x8x512xf32, #tpu.memory_space<vmem>>, vector<1x8x512xf32>
    %9 = vector.shape_cast %8 : vector<1x8x512xf32> to vector<8x512xf32>
    %10 = arith.addf %9, %6 : vector<8x512xf32>
    %11 = vector.extract_strided_slice %10 {offsets = [0, 0], sizes = [8, 128], strides = [1, 1]} : vector<8x512xf32> to vector<8x128xf32>
    %12 = arith.negf %11 : vector<8x128xf32>
    %13 = math.exp %12 : vector<8x128xf32>
    %cst_7 = arith.constant 1.000000e+00 : f32
    %14 = vector.broadcast %cst_7 : f32 to vector<8x128xf32>
    %15 = arith.addf %14, %13 : vector<8x128xf32>
    %16 = arith.divf %14, %15 : vector<8x128xf32>
    %17 = vector.extract_strided_slice %10 {offsets = [0, 128], sizes = [8, 128], strides = [1, 1]} : vector<8x512xf32> to vector<8x128xf32>
    %18 = arith.negf %17 : vector<8x128xf32>
    %19 = math.exp %18 : vector<8x128xf32>
    %cst_8 = arith.constant 1.000000e+00 : f32
    %20 = vector.broadcast %cst_8 : f32 to vector<8x128xf32>
    %21 = arith.addf %20, %19 : vector<8x128xf32>
    %22 = arith.divf %20, %21 : vector<8x128xf32>
    %23 = vector.extract_strided_slice %10 {offsets = [0, 256], sizes = [8, 128], strides = [1, 1]} : vector<8x512xf32> to vector<8x128xf32>
    %24 = math.tanh %23 : vector<8x128xf32>
    %25 = vector.extract_strided_slice %10 {offsets = [0, 384], sizes = [8, 128], strides = [1, 1]} : vector<8x512xf32> to vector<8x128xf32>
    %26 = arith.negf %25 : vector<8x128xf32>
    %27 = math.exp %26 : vector<8x128xf32>
    %cst_9 = arith.constant 1.000000e+00 : f32
    %28 = vector.broadcast %cst_9 : f32 to vector<8x128xf32>
    %29 = arith.addf %28, %27 : vector<8x128xf32>
    %30 = arith.divf %28, %29 : vector<8x128xf32>
    %c0_10 = arith.constant 0 : index
    %c0_11 = arith.constant 0 : index
    %31 = vector.load %arg8[%c0_10, %c0_11] : memref<8x128xf32, #tpu.memory_space<vmem>>, vector<8x128xf32>
    %32 = arith.mulf %22, %31 : vector<8x128xf32>
    %33 = arith.mulf %16, %24 : vector<8x128xf32>
    %34 = arith.addf %32, %33 : vector<8x128xf32>
    %35 = math.tanh %34 : vector<8x128xf32>
    %36 = arith.mulf %30, %35 : vector<8x128xf32>
    %c0_12 = arith.constant 0 : index
    %c0_13 = arith.constant 0 : index
    %37 = vector.load %arg7[%c0_12, %c0_13] : memref<8x128xf32, #tpu.memory_space<vmem>>, vector<8x128xf32>
    tpu.vector_store %arg7[%c0_12, %c0_13], %36 {strides = array<i32>} : memref<8x128xf32, #tpu.memory_space<vmem>>, vector<8x128xf32>,
    %c0_14 = arith.constant 0 : index
    %c0_15 = arith.constant 0 : index
    %38 = vector.load %arg8[%c0_14, %c0_15] : memref<8x128xf32, #tpu.memory_space<vmem>>, vector<8x128xf32>
    tpu.vector_store %arg8[%c0_14, %c0_15], %34 {strides = array<i32>} : memref<8x128xf32, #tpu.memory_space<vmem>>, vector<8x128xf32>,
    %c1_i32 = arith.constant 1 : i32
    %c0_16 = arith.constant 0 : index
    %c0_17 = arith.constant 0 : index
    %39 = vector.load %arg7[%c0_16, %c0_17] : memref<8x128xf32, #tpu.memory_space<vmem>>, vector<8x128xf32>
    %40 = arith.truncf %39 : vector<8x128xf32> to vector<8x128xbf16>
    %c0_18 = arith.constant 0 : index
    %c0_19 = arith.constant 0 : index
    %41 = vector.load %arg3[%c0_18, %c0_19] : memref<128x512xbf16, #tpu.memory_space<vmem>>, vector<128x512xbf16>
    %cst_20 = arith.constant dense<0.000000e+00> : vector<8x512xf32>
    %42 = tpu.matmul %40, %41, %cst_20 {dimension_numbers = #tpu.dot_dimension_numbers<[1], [0], [0], [1], [0, 0, 1, 1], [], []>} : vector<8x128xbf16>, vector<128x512xbf16>, vector<8x512xf32> -> vector<8x512xf32>
    %43 = arith.index_cast %c1_i32 : i32 to index
    %c0_21 = arith.constant 0 : index
    %c0_22 = arith.constant 0 : index
    %44 = vector.load %arg2[%43, %c0_21, %c0_22] : memref<8x8x512xf32, #tpu.memory_space<vmem>>, vector<1x8x512xf32>
    %45 = vector.shape_cast %44 : vector<1x8x512xf32> to vector<8x512xf32>
    %46 = arith.addf %45, %42 : vector<8x512xf32>
    %47 = vector.extract_strided_slice %46 {offsets = [0, 0], sizes = [8, 128], strides = [1, 1]} : vector<8x512xf32> to vector<8x128xf32>
    %48 = arith.negf %47 : vector<8x128xf32>
    %49 = math.exp %48 : vector<8x128xf32>
    %cst_23 = arith.constant 1.000000e+00 : f32
    %50 = vector.broadcast %cst_23 : f32 to vector<8x128xf32>
    %51 = arith.addf %50, %49 : vector<8x128xf32>
    %52 = arith.divf %50, %51 : vector<8x128xf32>
    %53 = vector.extract_strided_slice %46 {offsets = [0, 128], sizes = [8, 128], strides = [1, 1]} : vector<8x512xf32> to vector<8x128xf32>
    %54 = arith.negf %53 : vector<8x128xf32>
    %55 = math.exp %54 : vector<8x128xf32>
    %cst_24 = arith.constant 1.000000e+00 : f32
    %56 = vector.broadcast %cst_24 : f32 to vector<8x128xf32>
    %57 = arith.addf %56, %55 : vector<8x128xf32>
    %58 = arith.divf %56, %57 : vector<8x128xf32>
    %59 = vector.extract_strided_slice %46 {offsets = [0, 256], sizes = [8, 128], strides = [1, 1]} : vector<8x512xf32> to vector<8x128xf32>
    %60 = math.tanh %59 : vector<8x128xf32>
    %61 = vector.extract_strided_slice %46 {offsets = [0, 384], sizes = [8, 128], strides = [1, 1]} : vector<8x512xf32> to vector<8x128xf32>
    %62 = arith.negf %61 : vector<8x128xf32>
    %63 = math.exp %62 : vector<8x128xf32>
    %cst_25 = arith.constant 1.000000e+00 : f32
    %64 = vector.broadcast %cst_25 : f32 to vector<8x128xf32>
    %65 = arith.addf %64, %63 : vector<8x128xf32>
    %66 = arith.divf %64, %65 : vector<8x128xf32>
    %c0_26 = arith.constant 0 : index
    %c0_27 = arith.constant 0 : index
    %67 = vector.load %arg8[%c0_26, %c0_27] : memref<8x128xf32, #tpu.memory_space<vmem>>, vector<8x128xf32>
    %68 = arith.mulf %58, %67 : vector<8x128xf32>
    %69 = arith.mulf %52, %60 : vector<8x128xf32>
    %70 = arith.addf %68, %69 : vector<8x128xf32>
    %71 = math.tanh %70 : vector<8x128xf32>
    %72 = arith.mulf %66, %71 : vector<8x128xf32>
    %c0_28 = arith.constant 0 : index
    %c0_29 = arith.constant 0 : index
    %73 = vector.load %arg7[%c0_28, %c0_29] : memref<8x128xf32, #tpu.memory_space<vmem>>, vector<8x128xf32>
    tpu.vector_store %arg7[%c0_28, %c0_29], %72 {strides = array<i32>} : memref<8x128xf32, #tpu.memory_space<vmem>>, vector<8x128xf32>,
    %c0_30 = arith.constant 0 : index
    %c0_31 = arith.constant 0 : index
    %74 = vector.load %arg8[%c0_30, %c0_31] : memref<8x128xf32, #tpu.memory_space<vmem>>, vector<8x128xf32>
    tpu.vector_store %arg8[%c0_30, %c0_31], %70 {strides = array<i32>} : memref<8x128xf32, #tpu.memory_space<vmem>>, vector<8x128xf32>,
    %c2_i32 = arith.constant 2 : i32
    %c0_32 = arith.constant 0 : index
    %c0_33 = arith.constant 0 : index
    %75 = vector.load %arg7[%c0_32, %c0_33] : memref<8x128xf32, #tpu.memory_space<vmem>>, vector<8x128xf32>
    %76 = arith.truncf %75 : vector<8x128xf32> to vector<8x128xbf16>
    %c0_34 = arith.constant 0 : index
    %c0_35 = arith.constant 0 : index
    %77 = vector.load %arg3[%c0_34, %c0_35] : memref<128x512xbf16, #tpu.memory_space<vmem>>, vector<128x512xbf16>
    %cst_36 = arith.constant dense<0.000000e+00> : vector<8x512xf32>
    %78 = tpu.matmul %76, %77, %cst_36 {dimension_numbers = #tpu.dot_dimension_numbers<[1], [0], [0], [1], [0, 0, 1, 1], [], []>} : vector<8x128xbf16>, vector<128x512xbf16>, vector<8x512xf32> -> vector<8x512xf32>
    %79 = arith.index_cast %c2_i32 : i32 to index
    %c0_37 = arith.constant 0 : index
    %c0_38 = arith.constant 0 : index
    %80 = vector.load %arg2[%79, %c0_37, %c0_38] : memref<8x8x512xf32, #tpu.memory_space<vmem>>, vector<1x8x512xf32>
    %81 = vector.shape_cast %80 : vector<1x8x512xf32> to vector<8x512xf32>
    %82 = arith.addf %81, %78 : vector<8x512xf32>
    %83 = vector.extract_strided_slice %82 {offsets = [0, 0], sizes = [8, 128], strides = [1, 1]} : vector<8x512xf32> to vector<8x128xf32>
    %84 = arith.negf %83 : vector<8x128xf32>
    %85 = math.exp %84 : vector<8x128xf32>
    %cst_39 = arith.constant 1.000000e+00 : f32
    %86 = vector.broadcast %cst_39 : f32 to vector<8x128xf32>
    %87 = arith.addf %86, %85 : vector<8x128xf32>
    %88 = arith.divf %86, %87 : vector<8x128xf32>
    %89 = vector.extract_strided_slice %82 {offsets = [0, 128], sizes = [8, 128], strides = [1, 1]} : vector<8x512xf32> to vector<8x128xf32>
    %90 = arith.negf %89 : vector<8x128xf32>
    %91 = math.exp %90 : vector<8x128xf32>
    %cst_40 = arith.constant 1.000000e+00 : f32
    %92 = vector.broadcast %cst_40 : f32 to vector<8x128xf32>
    %93 = arith.addf %92, %91 : vector<8x128xf32>
    %94 = arith.divf %92, %93 : vector<8x128xf32>
    %95 = vector.extract_strided_slice %82 {offsets = [0, 256], sizes = [8, 128], strides = [1, 1]} : vector<8x512xf32> to vector<8x128xf32>
    %96 = math.tanh %95 : vector<8x128xf32>
    %97 = vector.extract_strided_slice %82 {offsets = [0, 384], sizes = [8, 128], strides = [1, 1]} : vector<8x512xf32> to vector<8x128xf32>
    %98 = arith.negf %97 : vector<8x128xf32>
    %99 = math.exp %98 : vector<8x128xf32>
    %cst_41 = arith.constant 1.000000e+00 : f32
    %100 = vector.broadcast %cst_41 : f32 to vector<8x128xf32>
    %101 = arith.addf %100, %99 : vector<8x128xf32>
    %102 = arith.divf %100, %101 : vector<8x128xf32>
    %c0_42 = arith.constant 0 : index
    %c0_43 = arith.constant 0 : index
    %103 = vector.load %arg8[%c0_42, %c0_43] : memref<8x128xf32, #tpu.memory_space<vmem>>, vector<8x128xf32>
    %104 = arith.mulf %94, %103 : vector<8x128xf32>
    %105 = arith.mulf %88, %96 : vector<8x128xf32>
    %106 = arith.addf %104, %105 : vector<8x128xf32>
    %107 = math.tanh %106 : vector<8x128xf32>
    %108 = arith.mulf %102, %107 : vector<8x128xf32>
    %c0_44 = arith.constant 0 : index
    %c0_45 = arith.constant 0 : index
    %109 = vector.load %arg7[%c0_44, %c0_45] : memref<8x128xf32, #tpu.memory_space<vmem>>, vector<8x128xf32>
    tpu.vector_store %arg7[%c0_44, %c0_45], %108 {strides = array<i32>} : memref<8x128xf32, #tpu.memory_space<vmem>>, vector<8x128xf32>,
    %c0_46 = arith.constant 0 : index
    %c0_47 = arith.constant 0 : index
    %110 = vector.load %arg8[%c0_46, %c0_47] : memref<8x128xf32, #tpu.memory_space<vmem>>, vector<8x128xf32>
    tpu.vector_store %arg8[%c0_46, %c0_47], %106 {strides = array<i32>} : memref<8x128xf32, #tpu.memory_space<vmem>>, vector<8x128xf32>,
    %c3_i32 = arith.constant 3 : i32
    %c0_48 = arith.constant 0 : index
    %c0_49 = arith.constant 0 : index
    %111 = vector.load %arg7[%c0_48, %c0_49] : memref<8x128xf32, #tpu.memory_space<vmem>>, vector<8x128xf32>
    %112 = arith.truncf %111 : vector<8x128xf32> to vector<8x128xbf16>
    %c0_50 = arith.constant 0 : index
    %c0_51 = arith.constant 0 : index
    %113 = vector.load %arg3[%c0_50, %c0_51] : memref<128x512xbf16, #tpu.memory_space<vmem>>, vector<128x512xbf16>
    %cst_52 = arith.constant dense<0.000000e+00> : vector<8x512xf32>
    %114 = tpu.matmul %112, %113, %cst_52 {dimension_numbers = #tpu.dot_dimension_numbers<[1], [0], [0], [1], [0, 0, 1, 1], [], []>} : vector<8x128xbf16>, vector<128x512xbf16>, vector<8x512xf32> -> vector<8x512xf32>
    %115 = arith.index_cast %c3_i32 : i32 to index
    %c0_53 = arith.constant 0 : index
    %c0_54 = arith.constant 0 : index
    %116 = vector.load %arg2[%115, %c0_53, %c0_54] : memref<8x8x512xf32, #tpu.memory_space<vmem>>, vector<1x8x512xf32>
    %117 = vector.shape_cast %116 : vector<1x8x512xf32> to vector<8x512xf32>
    %118 = arith.addf %117, %114 : vector<8x512xf32>
    %119 = vector.extract_strided_slice %118 {offsets = [0, 0], sizes = [8, 128], strides = [1, 1]} : vector<8x512xf32> to vector<8x128xf32>
    %120 = arith.negf %119 : vector<8x128xf32>
    %121 = math.exp %120 : vector<8x128xf32>
    %cst_55 = arith.constant 1.000000e+00 : f32
    %122 = vector.broadcast %cst_55 : f32 to vector<8x128xf32>
    %123 = arith.addf %122, %121 : vector<8x128xf32>
    %124 = arith.divf %122, %123 : vector<8x128xf32>
    %125 = vector.extract_strided_slice %118 {offsets = [0, 128], sizes = [8, 128], strides = [1, 1]} : vector<8x512xf32> to vector<8x128xf32>
    %126 = arith.negf %125 : vector<8x128xf32>
    %127 = math.exp %126 : vector<8x128xf32>
    %cst_56 = arith.constant 1.000000e+00 : f32
    %128 = vector.broadcast %cst_56 : f32 to vector<8x128xf32>
    %129 = arith.addf %128, %127 : vector<8x128xf32>
    %130 = arith.divf %128, %129 : vector<8x128xf32>
    %131 = vector.extract_strided_slice %118 {offsets = [0, 256], sizes = [8, 128], strides = [1, 1]} : vector<8x512xf32> to vector<8x128xf32>
    %132 = math.tanh %131 : vector<8x128xf32>
    %133 = vector.extract_strided_slice %118 {offsets = [0, 384], sizes = [8, 128], strides = [1, 1]} : vector<8x512xf32> to vector<8x128xf32>
    %134 = arith.negf %133 : vector<8x128xf32>
    %135 = math.exp %134 : vector<8x128xf32>
    %cst_57 = arith.constant 1.000000e+00 : f32
    %136 = vector.broadcast %cst_57 : f32 to vector<8x128xf32>
    %137 = arith.addf %136, %135 : vector<8x128xf32>
    %138 = arith.divf %136, %137 : vector<8x128xf32>
    %c0_58 = arith.constant 0 : index
    %c0_59 = arith.constant 0 : index
    %139 = vector.load %arg8[%c0_58, %c0_59] : memref<8x128xf32, #tpu.memory_space<vmem>>, vector<8x128xf32>
    %140 = arith.mulf %130, %139 : vector<8x128xf32>
    %141 = arith.mulf %124, %132 : vector<8x128xf32>
    %142 = arith.addf %140, %141 : vector<8x128xf32>
    %143 = math.tanh %142 : vector<8x128xf32>
    %144 = arith.mulf %138, %143 : vector<8x128xf32>
    %c0_60 = arith.constant 0 : index
    %c0_61 = arith.constant 0 : index
    %145 = vector.load %arg7[%c0_60, %c0_61] : memref<8x128xf32, #tpu.memory_space<vmem>>, vector<8x128xf32>
    tpu.vector_store %arg7[%c0_60, %c0_61], %144 {strides = array<i32>} : memref<8x128xf32, #tpu.memory_space<vmem>>, vector<8x128xf32>,
    %c0_62 = arith.constant 0 : index
    %c0_63 = arith.constant 0 : index
    %146 = vector.load %arg8[%c0_62, %c0_63] : memref<8x128xf32, #tpu.memory_space<vmem>>, vector<8x128xf32>
    tpu.vector_store %arg8[%c0_62, %c0_63], %142 {strides = array<i32>} : memref<8x128xf32, #tpu.memory_space<vmem>>, vector<8x128xf32>,
    %c4_i32 = arith.constant 4 : i32
    %c0_64 = arith.constant 0 : index
    %c0_65 = arith.constant 0 : index
    %147 = vector.load %arg7[%c0_64, %c0_65] : memref<8x128xf32, #tpu.memory_space<vmem>>, vector<8x128xf32>
    %148 = arith.truncf %147 : vector<8x128xf32> to vector<8x128xbf16>
    %c0_66 = arith.constant 0 : index
    %c0_67 = arith.constant 0 : index
    %149 = vector.load %arg3[%c0_66, %c0_67] : memref<128x512xbf16, #tpu.memory_space<vmem>>, vector<128x512xbf16>
    %cst_68 = arith.constant dense<0.000000e+00> : vector<8x512xf32>
    %150 = tpu.matmul %148, %149, %cst_68 {dimension_numbers = #tpu.dot_dimension_numbers<[1], [0], [0], [1], [0, 0, 1, 1], [], []>} : vector<8x128xbf16>, vector<128x512xbf16>, vector<8x512xf32> -> vector<8x512xf32>
    %151 = arith.index_cast %c4_i32 : i32 to index
    %c0_69 = arith.constant 0 : index
    %c0_70 = arith.constant 0 : index
    %152 = vector.load %arg2[%151, %c0_69, %c0_70] : memref<8x8x512xf32, #tpu.memory_space<vmem>>, vector<1x8x512xf32>
    %153 = vector.shape_cast %152 : vector<1x8x512xf32> to vector<8x512xf32>
    %154 = arith.addf %153, %150 : vector<8x512xf32>
    %155 = vector.extract_strided_slice %154 {offsets = [0, 0], sizes = [8, 128], strides = [1, 1]} : vector<8x512xf32> to vector<8x128xf32>
    %156 = arith.negf %155 : vector<8x128xf32>
    %157 = math.exp %156 : vector<8x128xf32>
    %cst_71 = arith.constant 1.000000e+00 : f32
    %158 = vector.broadcast %cst_71 : f32 to vector<8x128xf32>
    %159 = arith.addf %158, %157 : vector<8x128xf32>
    %160 = arith.divf %158, %159 : vector<8x128xf32>
    %161 = vector.extract_strided_slice %154 {offsets = [0, 128], sizes = [8, 128], strides = [1, 1]} : vector<8x512xf32> to vector<8x128xf32>
    %162 = arith.negf %161 : vector<8x128xf32>
    %163 = math.exp %162 : vector<8x128xf32>
    %cst_72 = arith.constant 1.000000e+00 : f32
    %164 = vector.broadcast %cst_72 : f32 to vector<8x128xf32>
    %165 = arith.addf %164, %163 : vector<8x128xf32>
    %166 = arith.divf %164, %165 : vector<8x128xf32>
    %167 = vector.extract_strided_slice %154 {offsets = [0, 256], sizes = [8, 128], strides = [1, 1]} : vector<8x512xf32> to vector<8x128xf32>
    %168 = math.tanh %167 : vector<8x128xf32>
    %169 = vector.extract_strided_slice %154 {offsets = [0, 384], sizes = [8, 128], strides = [1, 1]} : vector<8x512xf32> to vector<8x128xf32>
    %170 = arith.negf %169 : vector<8x128xf32>
    %171 = math.exp %170 : vector<8x128xf32>
    %cst_73 = arith.constant 1.000000e+00 : f32
    %172 = vector.broadcast %cst_73 : f32 to vector<8x128xf32>
    %173 = arith.addf %172, %171 : vector<8x128xf32>
    %174 = arith.divf %172, %173 : vector<8x128xf32>
    %c0_74 = arith.constant 0 : index
    %c0_75 = arith.constant 0 : index
    %175 = vector.load %arg8[%c0_74, %c0_75] : memref<8x128xf32, #tpu.memory_space<vmem>>, vector<8x128xf32>
    %176 = arith.mulf %166, %175 : vector<8x128xf32>
    %177 = arith.mulf %160, %168 : vector<8x128xf32>
    %178 = arith.addf %176, %177 : vector<8x128xf32>
    %179 = math.tanh %178 : vector<8x128xf32>
    %180 = arith.mulf %174, %179 : vector<8x128xf32>
    %c0_76 = arith.constant 0 : index
    %c0_77 = arith.constant 0 : index
    %181 = vector.load %arg7[%c0_76, %c0_77] : memref<8x128xf32, #tpu.memory_space<vmem>>, vector<8x128xf32>
    tpu.vector_store %arg7[%c0_76, %c0_77], %180 {strides = array<i32>} : memref<8x128xf32, #tpu.memory_space<vmem>>, vector<8x128xf32>,
    %c0_78 = arith.constant 0 : index
    %c0_79 = arith.constant 0 : index
    %182 = vector.load %arg8[%c0_78, %c0_79] : memref<8x128xf32, #tpu.memory_space<vmem>>, vector<8x128xf32>
    tpu.vector_store %arg8[%c0_78, %c0_79], %178 {strides = array<i32>} : memref<8x128xf32, #tpu.memory_space<vmem>>, vector<8x128xf32>,
    %c5_i32 = arith.constant 5 : i32
    %c0_80 = arith.constant 0 : index
    %c0_81 = arith.constant 0 : index
    %183 = vector.load %arg7[%c0_80, %c0_81] : memref<8x128xf32, #tpu.memory_space<vmem>>, vector<8x128xf32>
    %184 = arith.truncf %183 : vector<8x128xf32> to vector<8x128xbf16>
    %c0_82 = arith.constant 0 : index
    %c0_83 = arith.constant 0 : index
    %185 = vector.load %arg3[%c0_82, %c0_83] : memref<128x512xbf16, #tpu.memory_space<vmem>>, vector<128x512xbf16>
    %cst_84 = arith.constant dense<0.000000e+00> : vector<8x512xf32>
    %186 = tpu.matmul %184, %185, %cst_84 {dimension_numbers = #tpu.dot_dimension_numbers<[1], [0], [0], [1], [0, 0, 1, 1], [], []>} : vector<8x128xbf16>, vector<128x512xbf16>, vector<8x512xf32> -> vector<8x512xf32>
    %187 = arith.index_cast %c5_i32 : i32 to index
    %c0_85 = arith.constant 0 : index
    %c0_86 = arith.constant 0 : index
    %188 = vector.load %arg2[%187, %c0_85, %c0_86] : memref<8x8x512xf32, #tpu.memory_space<vmem>>, vector<1x8x512xf32>
    %189 = vector.shape_cast %188 : vector<1x8x512xf32> to vector<8x512xf32>
    %190 = arith.addf %189, %186 : vector<8x512xf32>
    %191 = vector.extract_strided_slice %190 {offsets = [0, 0], sizes = [8, 128], strides = [1, 1]} : vector<8x512xf32> to vector<8x128xf32>
    %192 = arith.negf %191 : vector<8x128xf32>
    %193 = math.exp %192 : vector<8x128xf32>
    %cst_87 = arith.constant 1.000000e+00 : f32
    %194 = vector.broadcast %cst_87 : f32 to vector<8x128xf32>
    %195 = arith.addf %194, %193 : vector<8x128xf32>
    %196 = arith.divf %194, %195 : vector<8x128xf32>
    %197 = vector.extract_strided_slice %190 {offsets = [0, 128], sizes = [8, 128], strides = [1, 1]} : vector<8x512xf32> to vector<8x128xf32>
    %198 = arith.negf %197 : vector<8x128xf32>
    %199 = math.exp %198 : vector<8x128xf32>
    %cst_88 = arith.constant 1.000000e+00 : f32
    %200 = vector.broadcast %cst_88 : f32 to vector<8x128xf32>
    %201 = arith.addf %200, %199 : vector<8x128xf32>
    %202 = arith.divf %200, %201 : vector<8x128xf32>
    %203 = vector.extract_strided_slice %190 {offsets = [0, 256], sizes = [8, 128], strides = [1, 1]} : vector<8x512xf32> to vector<8x128xf32>
    %204 = math.tanh %203 : vector<8x128xf32>
    %205 = vector.extract_strided_slice %190 {offsets = [0, 384], sizes = [8, 128], strides = [1, 1]} : vector<8x512xf32> to vector<8x128xf32>
    %206 = arith.negf %205 : vector<8x128xf32>
    %207 = math.exp %206 : vector<8x128xf32>
    %cst_89 = arith.constant 1.000000e+00 : f32
    %208 = vector.broadcast %cst_89 : f32 to vector<8x128xf32>
    %209 = arith.addf %208, %207 : vector<8x128xf32>
    %210 = arith.divf %208, %209 : vector<8x128xf32>
    %c0_90 = arith.constant 0 : index
    %c0_91 = arith.constant 0 : index
    %211 = vector.load %arg8[%c0_90, %c0_91] : memref<8x128xf32, #tpu.memory_space<vmem>>, vector<8x128xf32>
    %212 = arith.mulf %202, %211 : vector<8x128xf32>
    %213 = arith.mulf %196, %204 : vector<8x128xf32>
    %214 = arith.addf %212, %213 : vector<8x128xf32>
    %215 = math.tanh %214 : vector<8x128xf32>
    %216 = arith.mulf %210, %215 : vector<8x128xf32>
    %c0_92 = arith.constant 0 : index
    %c0_93 = arith.constant 0 : index
    %217 = vector.load %arg7[%c0_92, %c0_93] : memref<8x128xf32, #tpu.memory_space<vmem>>, vector<8x128xf32>
    tpu.vector_store %arg7[%c0_92, %c0_93], %216 {strides = array<i32>} : memref<8x128xf32, #tpu.memory_space<vmem>>, vector<8x128xf32>,
    %c0_94 = arith.constant 0 : index
    %c0_95 = arith.constant 0 : index
    %218 = vector.load %arg8[%c0_94, %c0_95] : memref<8x128xf32, #tpu.memory_space<vmem>>, vector<8x128xf32>
    tpu.vector_store %arg8[%c0_94, %c0_95], %214 {strides = array<i32>} : memref<8x128xf32, #tpu.memory_space<vmem>>, vector<8x128xf32>,
    %c6_i32 = arith.constant 6 : i32
    %c0_96 = arith.constant 0 : index
    %c0_97 = arith.constant 0 : index
    %219 = vector.load %arg7[%c0_96, %c0_97] : memref<8x128xf32, #tpu.memory_space<vmem>>, vector<8x128xf32>
    %220 = arith.truncf %219 : vector<8x128xf32> to vector<8x128xbf16>
    %c0_98 = arith.constant 0 : index
    %c0_99 = arith.constant 0 : index
    %221 = vector.load %arg3[%c0_98, %c0_99] : memref<128x512xbf16, #tpu.memory_space<vmem>>, vector<128x512xbf16>
    %cst_100 = arith.constant dense<0.000000e+00> : vector<8x512xf32>
    %222 = tpu.matmul %220, %221, %cst_100 {dimension_numbers = #tpu.dot_dimension_numbers<[1], [0], [0], [1], [0, 0, 1, 1], [], []>} : vector<8x128xbf16>, vector<128x512xbf16>, vector<8x512xf32> -> vector<8x512xf32>
    %223 = arith.index_cast %c6_i32 : i32 to index
    %c0_101 = arith.constant 0 : index
    %c0_102 = arith.constant 0 : index
    %224 = vector.load %arg2[%223, %c0_101, %c0_102] : memref<8x8x512xf32, #tpu.memory_space<vmem>>, vector<1x8x512xf32>
    %225 = vector.shape_cast %224 : vector<1x8x512xf32> to vector<8x512xf32>
    %226 = arith.addf %225, %222 : vector<8x512xf32>
    %227 = vector.extract_strided_slice %226 {offsets = [0, 0], sizes = [8, 128], strides = [1, 1]} : vector<8x512xf32> to vector<8x128xf32>
    %228 = arith.negf %227 : vector<8x128xf32>
    %229 = math.exp %228 : vector<8x128xf32>
    %cst_103 = arith.constant 1.000000e+00 : f32
    %230 = vector.broadcast %cst_103 : f32 to vector<8x128xf32>
    %231 = arith.addf %230, %229 : vector<8x128xf32>
    %232 = arith.divf %230, %231 : vector<8x128xf32>
    %233 = vector.extract_strided_slice %226 {offsets = [0, 128], sizes = [8, 128], strides = [1, 1]} : vector<8x512xf32> to vector<8x128xf32>
    %234 = arith.negf %233 : vector<8x128xf32>
    %235 = math.exp %234 : vector<8x128xf32>
    %cst_104 = arith.constant 1.000000e+00 : f32
    %236 = vector.broadcast %cst_104 : f32 to vector<8x128xf32>
    %237 = arith.addf %236, %235 : vector<8x128xf32>
    %238 = arith.divf %236, %237 : vector<8x128xf32>
    %239 = vector.extract_strided_slice %226 {offsets = [0, 256], sizes = [8, 128], strides = [1, 1]} : vector<8x512xf32> to vector<8x128xf32>
    %240 = math.tanh %239 : vector<8x128xf32>
    %241 = vector.extract_strided_slice %226 {offsets = [0, 384], sizes = [8, 128], strides = [1, 1]} : vector<8x512xf32> to vector<8x128xf32>
    %242 = arith.negf %241 : vector<8x128xf32>
    %243 = math.exp %242 : vector<8x128xf32>
    %cst_105 = arith.constant 1.000000e+00 : f32
    %244 = vector.broadcast %cst_105 : f32 to vector<8x128xf32>
    %245 = arith.addf %244, %243 : vector<8x128xf32>
    %246 = arith.divf %244, %245 : vector<8x128xf32>
    %c0_106 = arith.constant 0 : index
    %c0_107 = arith.constant 0 : index
    %247 = vector.load %arg8[%c0_106, %c0_107] : memref<8x128xf32, #tpu.memory_space<vmem>>, vector<8x128xf32>
    %248 = arith.mulf %238, %247 : vector<8x128xf32>
    %249 = arith.mulf %232, %240 : vector<8x128xf32>
    %250 = arith.addf %248, %249 : vector<8x128xf32>
    %251 = math.tanh %250 : vector<8x128xf32>
    %252 = arith.mulf %246, %251 : vector<8x128xf32>
    %c0_108 = arith.constant 0 : index
    %c0_109 = arith.constant 0 : index
    %253 = vector.load %arg7[%c0_108, %c0_109] : memref<8x128xf32, #tpu.memory_space<vmem>>, vector<8x128xf32>
    tpu.vector_store %arg7[%c0_108, %c0_109], %252 {strides = array<i32>} : memref<8x128xf32, #tpu.memory_space<vmem>>, vector<8x128xf32>,
    %c0_110 = arith.constant 0 : index
    %c0_111 = arith.constant 0 : index
    %254 = vector.load %arg8[%c0_110, %c0_111] : memref<8x128xf32, #tpu.memory_space<vmem>>, vector<8x128xf32>
    tpu.vector_store %arg8[%c0_110, %c0_111], %250 {strides = array<i32>} : memref<8x128xf32, #tpu.memory_space<vmem>>, vector<8x128xf32>,
    %c7_i32 = arith.constant 7 : i32
    %c0_112 = arith.constant 0 : index
    %c0_113 = arith.constant 0 : index
    %255 = vector.load %arg7[%c0_112, %c0_113] : memref<8x128xf32, #tpu.memory_space<vmem>>, vector<8x128xf32>
    %256 = arith.truncf %255 : vector<8x128xf32> to vector<8x128xbf16>
    %c0_114 = arith.constant 0 : index
    %c0_115 = arith.constant 0 : index
    %257 = vector.load %arg3[%c0_114, %c0_115] : memref<128x512xbf16, #tpu.memory_space<vmem>>, vector<128x512xbf16>
    %cst_116 = arith.constant dense<0.000000e+00> : vector<8x512xf32>
    %258 = tpu.matmul %256, %257, %cst_116 {dimension_numbers = #tpu.dot_dimension_numbers<[1], [0], [0], [1], [0, 0, 1, 1], [], []>} : vector<8x128xbf16>, vector<128x512xbf16>, vector<8x512xf32> -> vector<8x512xf32>
    %259 = arith.index_cast %c7_i32 : i32 to index
    %c0_117 = arith.constant 0 : index
    %c0_118 = arith.constant 0 : index
    %260 = vector.load %arg2[%259, %c0_117, %c0_118] : memref<8x8x512xf32, #tpu.memory_space<vmem>>, vector<1x8x512xf32>
    %261 = vector.shape_cast %260 : vector<1x8x512xf32> to vector<8x512xf32>
    %262 = arith.addf %261, %258 : vector<8x512xf32>
    %263 = vector.extract_strided_slice %262 {offsets = [0, 0], sizes = [8, 128], strides = [1, 1]} : vector<8x512xf32> to vector<8x128xf32>
    %264 = arith.negf %263 : vector<8x128xf32>
    %265 = math.exp %264 : vector<8x128xf32>
    %cst_119 = arith.constant 1.000000e+00 : f32
    %266 = vector.broadcast %cst_119 : f32 to vector<8x128xf32>
    %267 = arith.addf %266, %265 : vector<8x128xf32>
    %268 = arith.divf %266, %267 : vector<8x128xf32>
    %269 = vector.extract_strided_slice %262 {offsets = [0, 128], sizes = [8, 128], strides = [1, 1]} : vector<8x512xf32> to vector<8x128xf32>
    %270 = arith.negf %269 : vector<8x128xf32>
    %271 = math.exp %270 : vector<8x128xf32>
    %cst_120 = arith.constant 1.000000e+00 : f32
    %272 = vector.broadcast %cst_120 : f32 to vector<8x128xf32>
    %273 = arith.addf %272, %271 : vector<8x128xf32>
    %274 = arith.divf %272, %273 : vector<8x128xf32>
    %275 = vector.extract_strided_slice %262 {offsets = [0, 256], sizes = [8, 128], strides = [1, 1]} : vector<8x512xf32> to vector<8x128xf32>
    %276 = math.tanh %275 : vector<8x128xf32>
    %277 = vector.extract_strided_slice %262 {offsets = [0, 384], sizes = [8, 128], strides = [1, 1]} : vector<8x512xf32> to vector<8x128xf32>
    %278 = arith.negf %277 : vector<8x128xf32>
    %279 = math.exp %278 : vector<8x128xf32>
    %cst_121 = arith.constant 1.000000e+00 : f32
    %280 = vector.broadcast %cst_121 : f32 to vector<8x128xf32>
    %281 = arith.addf %280, %279 : vector<8x128xf32>
    %282 = arith.divf %280, %281 : vector<8x128xf32>
    %c0_122 = arith.constant 0 : index
    %c0_123 = arith.constant 0 : index
    %283 = vector.load %arg8[%c0_122, %c0_123] : memref<8x128xf32, #tpu.memory_space<vmem>>, vector<8x128xf32>
    %284 = arith.mulf %274, %283 : vector<8x128xf32>
    %285 = arith.mulf %268, %276 : vector<8x128xf32>
    %286 = arith.addf %284, %285 : vector<8x128xf32>
    %287 = math.tanh %286 : vector<8x128xf32>
    %288 = arith.mulf %282, %287 : vector<8x128xf32>
    %c0_124 = arith.constant 0 : index
    %c0_125 = arith.constant 0 : index
    %289 = vector.load %arg7[%c0_124, %c0_125] : memref<8x128xf32, #tpu.memory_space<vmem>>, vector<8x128xf32>
    tpu.vector_store %arg7[%c0_124, %c0_125], %288 {strides = array<i32>} : memref<8x128xf32, #tpu.memory_space<vmem>>, vector<8x128xf32>,
    %c0_126 = arith.constant 0 : index
    %c0_127 = arith.constant 0 : index
    %290 = vector.load %arg8[%c0_126, %c0_127] : memref<8x128xf32, #tpu.memory_space<vmem>>, vector<8x128xf32>
    tpu.vector_store %arg8[%c0_126, %c0_127], %286 {strides = array<i32>} : memref<8x128xf32, #tpu.memory_space<vmem>>, vector<8x128xf32>,
    %c8_i32 = arith.constant 8 : i32
    %c0_i32_128 = arith.constant 0 : i32
    %291 = arith.cmpi eq, %arg1, %c0_i32_128 : i32
    %292 = arith.extui %291 : i1 to i32
    %c0_i32_129 = arith.constant 0 : i32
    %293 = arith.cmpi ne, %292, %c0_i32_129 : i32
    scf.if %293 {
      %c0_130 = arith.constant 0 : index
      %c0_131 = arith.constant 0 : index
      %294 = vector.load %arg7[%c0_130, %c0_131] : memref<8x128xf32, #tpu.memory_space<vmem>>, vector<8x128xf32>
      %295 = arith.truncf %294 : vector<8x128xf32> to vector<8x128xbf16>
      %c0_132 = arith.constant 0 : index
      %c0_133 = arith.constant 0 : index
      %296 = vector.load %arg4[%c0_132, %c0_133] : memref<128x4xbf16, #tpu.memory_space<vmem>>, vector<128x4xbf16>
      %cst_134 = arith.constant dense<0.000000e+00> : vector<8x4xf32>
      %297 = tpu.matmul %295, %296, %cst_134 {dimension_numbers = #tpu.dot_dimension_numbers<[1], [0], [0], [1], [0, 0, 1, 1], [], []>} : vector<8x128xbf16>, vector<128x4xbf16>, vector<8x4xf32> -> vector<8x4xf32>
      %c0_135 = arith.constant 0 : index
      %c0_136 = arith.constant 0 : index
      %298 = vector.load %arg5[%c0_135, %c0_136] : memref<1x4xf32, #tpu.memory_space<vmem>>, vector<1x4xf32>
      %299 = vector.broadcast %298 : vector<1x4xf32> to vector<8x4xf32>
      %300 = arith.addf %297, %299 : vector<8x4xf32>
      %c0_137 = arith.constant 0 : index
      %c0_138 = arith.constant 0 : index
      %301 = vector.load %arg6[%c0_137, %c0_138] : memref<8x4xf32, #tpu.memory_space<vmem>>, vector<8x4xf32>
      tpu.vector_store %arg6[%c0_137, %c0_138], %300 {strides = array<i32>} : memref<8x4xf32, #tpu.memory_space<vmem>>, vector<8x4xf32>,
    } else {
    }
    return
  }
  func.func @transform_0(%arg0: i32, %arg1: i32) -> (i32, i32, i32) {
    %c0_i32 = arith.constant 0 : i32
    %c0_i32_0 = arith.constant 0 : i32
    return %arg1, %arg0, %c0_i32 : i32, i32, i32
  }
  func.func @transform_1(%arg0: i32, %arg1: i32) -> (i32, i32) {
    %c0_i32 = arith.constant 0 : i32
    %c0_i32_0 = arith.constant 0 : i32
    %c0_i32_1 = arith.constant 0 : i32
    return %c0_i32, %c0_i32_0 : i32, i32
  }
  func.func @transform_2(%arg0: i32, %arg1: i32) -> (i32, i32) {
    %c0_i32 = arith.constant 0 : i32
    %c0_i32_0 = arith.constant 0 : i32
    %c0_i32_1 = arith.constant 0 : i32
    return %c0_i32, %c0_i32_0 : i32, i32
  }
  func.func @transform_3(%arg0: i32, %arg1: i32) -> (i32, i32) {
    %c0_i32 = arith.constant 0 : i32
    %c0_i32_0 = arith.constant 0 : i32
    %c0_i32_1 = arith.constant 0 : i32
    return %c0_i32, %c0_i32_0 : i32, i32
  }
  func.func @transform_4(%arg0: i32, %arg1: i32) -> (i32, i32) {
    %c0_i32 = arith.constant 0 : i32
    %c0_i32_0 = arith.constant 0 : i32
    return %arg0, %c0_i32 : i32, i32
  }
}

</mosaic_0001>

<llo_original>
// kernel: tpu_custom_call.1
$region0: #{tpu_custom_call.1}
  #allocation0 [shape = 'u32[]', space=smem, size = 0x4, offset = 0x4, fixed_abs, tag = 'smem constant byte address 0x4 - core index']
  #allocation1 [shape = 'u32[144,128]{1,0:T(1,128)}', space=vmem, size = 0x12000, scoped, tag = 'internal scratch']
  #allocation2 [shape = 'f32[8,128]{1,0:T(8,128)}', space=vmem, size = 0x1000, scoped, tag = 'scratch operand']
  #allocation3 [shape = 'f32[8,128]{1,0:T(8,128)}', space=vmem, size = 0x1000, scoped, tag = 'scratch operand']
  %s0 = inlined_call_operand.hbm [shape: f32[8,8,512], index: 0, kind: input, shape index: {}]
  %s1 = inlined_call_operand.hbm [shape: bf16[128,512], index: 1, kind: input, shape index: {}]
  %s2 = inlined_call_operand.vmem [shape: bf16[128,4], index: 2, kind: input, shape index: {}]
  %s3 = inlined_call_operand.vmem [shape: f32[1,4], index: 3, kind: input, shape index: {}]
  %s4 = inlined_call_operand.vmem [shape: f32[8,4], index: 4, kind: output, shape index: {}]
  %s5 = sld [smem:[#allocation0]]
  $region42: #{tpu_custom_call.1} parent=0
    _
  %s7 = ssub.s32 1, %s5
  %s8 = scalar_select 0, %s7, %s5
  $region1: #{tpu_custom_call.1} parent=0
    #allocation4 [shape = 'u8[131072]{0}', space=vmem, size = 0x20000, scoped, tag = 'input window, operand 0, single buffered']
    #allocation5 [shape = 's32[1]{0}', space=sflag, size = 0x4, scoped, tag = 'scoped memory for tpu_custom_call.1']
    #allocation6 [shape = 'u8[131072]{0}', space=vmem, size = 0x20000, scoped, tag = 'input window, operand 1, single buffered']
    #allocation7 [shape = 's32[1]{0}', space=sflag, size = 0x4, scoped, tag = 'scoped memory for tpu_custom_call.1']
    %9 = vsyncpa [#allocation5], 0
    %10 = vsyncpa [#allocation7], 0
    // Predicated region
    $region2: #{tpu_custom_call.1} parent=1 // pred_check
      _
    $region3: #{tpu_custom_call.1} parent=1 // pred_check_branch
      %12 = sbr.rel (0) target = $region5
    $region4: #{tpu_custom_call.1} parent=1 // pred_region
      %s14 = ssub.s32 4096, 4096
      %15 = vsyncadd [#allocation5], %s14
      %s16 = sshll.u32 [#allocation4], 4
      %s17 = int_to_ptr.vmem [resolvable:$true] %s16
      %22 = dma.hbm_to_vmem [thread:$0]  %s0, 4096, %s17, [#allocation5], 512, 512, 32
    $region5: #{tpu_custom_call.1} parent=1 // pred_fallthru
      _
    // Predicated region
    $region6: #{tpu_custom_call.1} parent=1 // pred_check
      _
    $region7: #{tpu_custom_call.1} parent=1 // pred_check_branch
      %24 = sbr.rel (0) target = $region9
    $region8: #{tpu_custom_call.1} parent=1 // pred_region
      %s26 = ssub.s32 4096, 4096
      %27 = vsyncadd [#allocation7], %s26
      %s28 = sshll.u32 [#allocation6], 4
      %s29 = int_to_ptr.vmem [resolvable:$true] %s28
      %34 = dma.hbm_to_vmem [thread:$0]  %s1, 4096, %s29, [#allocation7], 256, 256, 16
    $region9: #{tpu_custom_call.1} parent=1 // pred_fallthru
      _
    // Predicated region
    $region10: #{tpu_custom_call.1} parent=1 // pred_check
      _
    $region11: #{tpu_custom_call.1} parent=1 // pred_check_branch
      %36 = sbr.rel (0) target = $region13
    $region12: #{tpu_custom_call.1} parent=1 // pred_region
      _
    $region13: #{tpu_custom_call.1} parent=1 // pred_fallthru
      _
    // Predicated region
    $region14: #{tpu_custom_call.1} parent=1 // pred_check
      _
    $region15: #{tpu_custom_call.1} parent=1 // pred_check_branch
      %38 = sbr.rel (0) target = $region17
    $region16: #{tpu_custom_call.1} parent=1 // pred_region
      _
    $region17: #{tpu_custom_call.1} parent=1 // pred_fallthru
      _
    // Predicated region
    $region18: #{tpu_custom_call.1} parent=1 // pred_check
      _
    $region19: #{tpu_custom_call.1} parent=1 // pred_check_branch
      %40 = sbr.rel (0) target = $region21
    $region20: #{tpu_custom_call.1} parent=1 // pred_region
      %41 = dma.done [#allocation5], 4096
    $region21: #{tpu_custom_call.1} parent=1 // pred_fallthru
      _
    // Predicated region
    $region22: #{tpu_custom_call.1} parent=1 // pred_check
      _
    $region23: #{tpu_custom_call.1} parent=1 // pred_check_branch
      %43 = sbr.rel (0) target = $region25
    $region24: #{tpu_custom_call.1} parent=1 // pred_region
      %44 = dma.done [#allocation7], 4096
    $region25: #{tpu_custom_call.1} parent=1 // pred_fallthru
      _
    %p46 = scmp.eq.s32.totalorder 0, 0
    // Predicated region
    $region26: #{tpu_custom_call.1} parent=1 // pred_check
      %p47 = pneg %p46
    $region27: #{tpu_custom_call.1} parent=1 // pred_check_branch
      %49 = sbr.rel (%p47) target = $region29
    $region28: #{tpu_custom_call.1} parent=1 // pred_region
      %50 = vst [vmem:[#allocation2] sm:$0xff] 0.0
      %51 = vst [vmem:[#allocation3] sm:$0xff] 0.0
    $region29: #{tpu_custom_call.1} parent=1 // pred_fallthru
      _
    %v52 = vld [vmem:[#allocation2] sm:$0xff]
    %v53 = vpack.c.bf16 %v52, %v52
    %v54 = vld [vmem:[#allocation6] sm:$0xff]
    %v55 = vld [vmem:[#allocation6 + $0x8] sm:$0xff]
    %v56 = vld [vmem:[#allocation6 + $0x10] sm:$0xff]
    %v57 = vld [vmem:[#allocation6 + $0x18] sm:$0xff]
    %v58 = vld [vmem:[#allocation6 + $0x20] sm:$0xff]
    %v59 = vld [vmem:[#allocation6 + $0x28] sm:$0xff]
    %v60 = vld [vmem:[#allocation6 + $0x30] sm:$0xff]
    %v61 = vld [vmem:[#allocation6 + $0x38] sm:$0xff]
    %v62 = vld [vmem:[#allocation6 + $0x40] sm:$0xff]
    %v63 = vld [vmem:[#allocation6 + $0x48] sm:$0xff]
    %v64 = vld [vmem:[#allocation6 + $0x50] sm:$0xff]
    %v65 = vld [vmem:[#allocation6 + $0x58] sm:$0xff]
    %v66 = vld [vmem:[#allocation6 + $0x60] sm:$0xff]
    %v67 = vld [vmem:[#allocation6 + $0x68] sm:$0xff]
    %v68 = vld [vmem:[#allocation6 + $0x70] sm:$0xff]
    %v69 = vld [vmem:[#allocation6 + $0x78] sm:$0xff]
    %v70 = vld [vmem:[#allocation6 + $0x80] sm:$0xff]
    %v71 = vld [vmem:[#allocation6 + $0x88] sm:$0xff]
    %v72 = vld [vmem:[#allocation6 + $0x90] sm:$0xff]
    %v73 = vld [vmem:[#allocation6 + $0x98] sm:$0xff]
    %v74 = vld [vmem:[#allocation6 + $0xa0] sm:$0xff]
    %v75 = vld [vmem:[#allocation6 + $0xa8] sm:$0xff]
    %v76 = vld [vmem:[#allocation6 + $0xb0] sm:$0xff]
    %v77 = vld [vmem:[#allocation6 + $0xb8] sm:$0xff]
    %v78 = vld [vmem:[#allocation6 + $0xc0] sm:$0xff]
    %v79 = vld [vmem:[#allocation6 + $0xc8] sm:$0xff]
    %v80 = vld [vmem:[#allocation6 + $0xd0] sm:$0xff]
    %v81 = vld [vmem:[#allocation6 + $0xd8] sm:$0xff]
    %v82 = vld [vmem:[#allocation6 + $0xe0] sm:$0xff]
    %v83 = vld [vmem:[#allocation6 + $0xe8] sm:$0xff]
    %v84 = vld [vmem:[#allocation6 + $0xf0] sm:$0xff]
    %v85 = vld [vmem:[#allocation6 + $0xf8] sm:$0xff]
    %v118 = vunpack.c.l.b16 %v54
    %v119 = vunpack.c.h.b16 %v54
    %v120 = vunpack.c.l.b16 %v55
    %v121 = vunpack.c.h.b16 %v55
    %v122 = vunpack.c.l.b16 %v56
    %v123 = vunpack.c.h.b16 %v56
    %v124 = vunpack.c.l.b16 %v57
    %v125 = vunpack.c.h.b16 %v57
    %v126 = vunpack.c.l.b16 %v58
    %v127 = vunpack.c.h.b16 %v58
    %v128 = vunpack.c.l.b16 %v59
    %v129 = vunpack.c.h.b16 %v59
    %v130 = vunpack.c.l.b16 %v60
    %v131 = vunpack.c.h.b16 %v60
    %v132 = vunpack.c.l.b16 %v61
    %v133 = vunpack.c.h.b16 %v61
    %v134 = vunpack.c.l.b16 %v62
    %v135 = vunpack.c.h.b16 %v62
    %v136 = vunpack.c.l.b16 %v63
    %v137 = vunpack.c.h.b16 %v63
    %v138 = vunpack.c.l.b16 %v64
    %v139 = vunpack.c.h.b16 %v64
    %v140 = vunpack.c.l.b16 %v65
    %v141 = vunpack.c.h.b16 %v65
    %v142 = vunpack.c.l.b16 %v66
    %v143 = vunpack.c.h.b16 %v66
    %v144 = vunpack.c.l.b16 %v67
    %v145 = vunpack.c.h.b16 %v67
    %v146 = vunpack.c.l.b16 %v68
    %v147 = vunpack.c.h.b16 %v68
    %v148 = vunpack.c.l.b16 %v69
    %v149 = vunpack.c.h.b16 %v69
    %v150 = vunpack.c.l.b16 %v70
    %v151 = vunpack.c.h.b16 %v70
    %v152 = vunpack.c.l.b16 %v71
    %v153 = vunpack.c.h.b16 %v71
    %v154 = vunpack.c.l.b16 %v72
    %v155 = vunpack.c.h.b16 %v72
    %v156 = vunpack.c.l.b16 %v73
    %v157 = vunpack.c.h.b16 %v73
    %v158 = vunpack.c.l.b16 %v74
    %v159 = vunpack.c.h.b16 %v74
    %v160 = vunpack.c.l.b16 %v75
    %v161 = vunpack.c.h.b16 %v75
    %v162 = vunpack.c.l.b16 %v76
    %v163 = vunpack.c.h.b16 %v76
    %v164 = vunpack.c.l.b16 %v77
    %v165 = vunpack.c.h.b16 %v77
    %v166 = vunpack.c.l.b16 %v78
    %v167 = vunpack.c.h.b16 %v78
    %v168 = vunpack.c.l.b16 %v79
    %v169 = vunpack.c.h.b16 %v79
    %v170 = vunpack.c.l.b16 %v80
    %v171 = vunpack.c.h.b16 %v80
    %v172 = vunpack.c.l.b16 %v81
    %v173 = vunpack.c.h.b16 %v81
    %v174 = vunpack.c.l.b16 %v82
    %v175 = vunpack.c.h.b16 %v82
    %v176 = vunpack.c.l.b16 %v83
    %v177 = vunpack.c.h.b16 %v83
    %v178 = vunpack.c.l.b16 %v84
    %v179 = vunpack.c.h.b16 %v84
    %v180 = vunpack.c.l.b16 %v85
    %v181 = vunpack.c.h.b16 %v85
    %v182 = vpack.c.b16 %v122, %v118
    %v183 = vpack.c.b16 %v123, %v119
    %v184 = vpack.c.b16 %v124, %v120
    %v185 = vpack.c.b16 %v125, %v121
    %v186 = vpack.c.b16 %v130, %v126
    %v187 = vpack.c.b16 %v131, %v127
    %v188 = vpack.c.b16 %v132, %v128
    %v189 = vpack.c.b16 %v133, %v129
    %v190 = vpack.c.b16 %v138, %v134
    %v191 = vpack.c.b16 %v139, %v135
    %v192 = vpack.c.b16 %v140, %v136
    %v193 = vpack.c.b16 %v141, %v137
    %v194 = vpack.c.b16 %v146, %v142
    %v195 = vpack.c.b16 %v147, %v143
    %v196 = vpack.c.b16 %v148, %v144
    %v197 = vpack.c.b16 %v149, %v145
    %v198 = vpack.c.b16 %v154, %v150
    %v199 = vpack.c.b16 %v155, %v151
    %v200 = vpack.c.b16 %v156, %v152
    %v201 = vpack.c.b16 %v157, %v153
    %v202 = vpack.c.b16 %v162, %v158
    %v203 = vpack.c.b16 %v163, %v159
    %v204 = vpack.c.b16 %v164, %v160
    %v205 = vpack.c.b16 %v165, %v161
    %v206 = vpack.c.b16 %v170, %v166
    %v207 = vpack.c.b16 %v171, %v167
    %v208 = vpack.c.b16 %v172, %v168
    %v209 = vpack.c.b16 %v173, %v169
    %v210 = vpack.c.b16 %v178, %v174
    %v211 = vpack.c.b16 %v179, %v175
    %v212 = vpack.c.b16 %v180, %v176
    %v213 = vpack.c.b16 %v181, %v177
    %246 = vmatprep.subr.bf16.mxu0 %v183
    %247 = vmatpush1.bf16.msra.mxu0 %v182
    %248 = vmatprep.subr.bf16.mxu0 %v187
    %249 = vmatpush1.bf16.msra.mxu0 %v186
    %250 = vmatprep.subr.bf16.mxu0 %v191
    %251 = vmatpush1.bf16.msra.mxu0 %v190
    %252 = vmatprep.subr.bf16.mxu0 %v195
    %253 = vmatpush1.bf16.msra.mxu0 %v194
    %254 = vmatprep.subr.bf16.mxu0 %v199
    %255 = vmatpush1.bf16.msra.mxu0 %v198
    %256 = vmatprep.subr.bf16.mxu0 %v203
    %257 = vmatpush1.bf16.msra.mxu0 %v202
    %258 = vmatprep.subr.bf16.mxu0 %v207
    %259 = vmatpush1.bf16.msra.mxu0 %v206
    %260 = vmatprep.subr.bf16.mxu0 %v211
    %261 = vmatpush1.bf16.msra.mxu0 %v210
    %262 = vmatprep.subr.bf16.mxu0 0
    %263 = vmatpush1.bf16.msra.mxu0 0
    %264 = vmatprep.subr.bf16.mxu0 0
    %265 = vmatpush1.bf16.msra.mxu0 0
    %266 = vmatprep.subr.bf16.mxu0 0
    %267 = vmatpush1.bf16.msra.mxu0 0
    %268 = vmatprep.subr.bf16.mxu0 0
    %269 = vmatpush1.bf16.msra.mxu0 0
    %270 = vmatprep.subr.bf16.mxu0 0
    %271 = vmatpush1.bf16.msra.mxu0 0
    %272 = vmatprep.subr.bf16.mxu0 0
    %273 = vmatpush1.bf16.msra.mxu0 0
    %274 = vmatprep.subr.bf16.mxu0 0
    %275 = vmatpush1.bf16.msra.mxu0 0
    %276 = vmatprep.subr.bf16.mxu0 0
    %277 = vmatpush1.bf16.msra.mxu0 0
    %278 = vmatprep.mubr.bf16.mxu0 0
    %279 = vmatmul.mubr.bf16.gmra.mrb[0].mxu0 %v53
    %v280 = vpop.f32.mrb[0].mxu0
    %v281 = vadd.f32 0.0, %v280
    %v282 = vpop.f32.mrb[0].mxu0
    %v283 = vadd.f32 0.0, %v282
    %v284 = vpop.f32.mrb[0].mxu0
    %v285 = vpop.f32.mrb[0].mxu0
    %286 = vdwg.mxu0
    %287 = vmatprep.subr.bf16.mxu0 %v185
    %288 = vmatpush1.bf16.msra.mxu0 %v184
    %289 = vmatprep.subr.bf16.mxu0 %v189
    %290 = vmatpush1.bf16.msra.mxu0 %v188
    %291 = vmatprep.subr.bf16.mxu0 %v193
    %292 = vmatpush1.bf16.msra.mxu0 %v192
    %293 = vmatprep.subr.bf16.mxu0 %v197
    %294 = vmatpush1.bf16.msra.mxu0 %v196
    %295 = vmatprep.subr.bf16.mxu0 %v201
    %296 = vmatpush1.bf16.msra.mxu0 %v200
    %297 = vmatprep.subr.bf16.mxu0 %v205
    %298 = vmatpush1.bf16.msra.mxu0 %v204
    %299 = vmatprep.subr.bf16.mxu0 %v209
    %300 = vmatpush1.bf16.msra.mxu0 %v208
    %301 = vmatprep.subr.bf16.mxu0 %v213
    %302 = vmatpush1.bf16.msra.mxu0 %v212
    %303 = vmatprep.subr.bf16.mxu0 0
    %304 = vmatpush1.bf16.msra.mxu0 0
    %305 = vmatprep.subr.bf16.mxu0 0
    %306 = vmatpush1.bf16.msra.mxu0 0
    %307 = vmatprep.subr.bf16.mxu0 0
    %308 = vmatpush1.bf16.msra.mxu0 0
    %309 = vmatprep.subr.bf16.mxu0 0
    %310 = vmatpush1.bf16.msra.mxu0 0
    %311 = vmatprep.subr.bf16.mxu0 0
    %312 = vmatpush1.bf16.msra.mxu0 0
    %313 = vmatprep.subr.bf16.mxu0 0
    %314 = vmatpush1.bf16.msra.mxu0 0
    %315 = vmatprep.subr.bf16.mxu0 0
    %316 = vmatpush1.bf16.msra.mxu0 0
    %317 = vmatprep.subr.bf16.mxu0 0
    %318 = vmatpush1.bf16.msra.mxu0 0
    %319 = vmatprep.mubr.bf16.mxu0 0
    %320 = vmatmul.mubr.bf16.gmra.mrb[0].mxu0 %v53
    %v321 = vpop.f32.mrb[0].mxu0
    %v322 = vadd.f32 0.0, %v321
    %v323 = vpop.f32.mrb[0].mxu0
    %v324 = vadd.f32 0.0, %v323
    %v325 = vpop.f32.mrb[0].mxu0
    %v326 = vpop.f32.mrb[0].mxu0
    %327 = vdwg.mxu0
    %v328 = vld [vmem:[#allocation4] sm:$0xff]
    %v329 = vld [vmem:[#allocation4 + $0x8] sm:$0xff]
    %v330 = vld [vmem:[#allocation4 + $0x10] sm:$0xff]
    %v331 = vld [vmem:[#allocation4 + $0x18] sm:$0xff]
    %v332 = vadd.f32 %v328, %v281
    %v333 = vadd.f32 %v329, %v283
    %v334 = vadd.f32 %v330, %v322
    %v335 = vadd.f32 %v331, %v324
    %v336 = vxor.u32 %v332, 2147483648
    %v337 = vmul.f32 %v336, 1.442695
    %v338 = vpow.pop %v337
    %v339 = vadd.f32 %v338, 1.0
    %v340 = vrcp.pop %v339
    %v341 = vmul.f32 1.0, %v340
    %v342 = vxor.u32 %v333, 2147483648
    %v343 = vmul.f32 %v342, 1.442695
    %v344 = vpow.pop %v343
    %v345 = vadd.f32 %v344, 1.0
    %v346 = vrcp.pop %v345
    %v347 = vmul.f32 1.0, %v346
    %v348 = vtanh.pop %v334
    %v349 = vxor.u32 %v335, 2147483648
    %v350 = vmul.f32 %v349, 1.442695
    %v351 = vpow.pop %v350
    %v352 = vadd.f32 %v351, 1.0
    %v353 = vrcp.pop %v352
    %v354 = vmul.f32 1.0, %v353
    %v355 = vld [vmem:[#allocation3] sm:$0xff]
    %v356 = vmul.f32 %v347, %v355
    %v357 = vmul.f32 %v341, %v348
    %v358 = vadd.f32 %v356, %v357
    %v359 = vtanh.pop %v358
    %v360 = vmul.f32 %v354, %v359
    %361 = vst [vmem:[#allocation2] sm:$0xff] %v360
    %362 = vst [vmem:[#allocation3] sm:$0xff] %v358
    %v363 = vld [vmem:[#allocation2] sm:$0xff]
    %v364 = vpack.c.bf16 %v363, %v363
    %v365 = vld [vmem:[#allocation6] sm:$0xff]
    %v366 = vld [vmem:[#allocation6 + $0x8] sm:$0xff]
    %v367 = vld [vmem:[#allocation6 + $0x10] sm:$0xff]
    %v368 = vld [vmem:[#allocation6 + $0x18] sm:$0xff]
    %v369 = vld [vmem:[#allocation6 + $0x20] sm:$0xff]
    %v370 = vld [vmem:[#allocation6 + $0x28] sm:$0xff]
    %v371 = vld [vmem:[#allocation6 + $0x30] sm:$0xff]
    %v372 = vld [vmem:[#allocation6 + $0x38] sm:$0xff]
    %v373 = vld [vmem:[#allocation6 + $0x40] sm:$0xff]
    %v374 = vld [vmem:[#allocation6 + $0x48] sm:$0xff]
    %v375 = vld [vmem:[#allocation6 + $0x50] sm:$0xff]
    %v376 = vld [vmem:[#allocation6 + $0x58] sm:$0xff]
    %v377 = vld [vmem:[#allocation6 + $0x60] sm:$0xff]
    %v378 = vld [vmem:[#allocation6 + $0x68] sm:$0xff]
    %v379 = vld [vmem:[#allocation6 + $0x70] sm:$0xff]
    %v380 = vld [vmem:[#allocation6 + $0x78] sm:$0xff]
    %v381 = vld [vmem:[#allocation6 + $0x80] sm:$0xff]
    %v382 = vld [vmem:[#allocation6 + $0x88] sm:$0xff]
    %v383 = vld [vmem:[#allocation6 + $0x90] sm:$0xff]
    %v384 = vld [vmem:[#allocation6 + $0x98] sm:$0xff]
    %v385 = vld [vmem:[#allocation6 + $0xa0] sm:$0xff]
    %v386 = vld [vmem:[#allocation6 + $0xa8] sm:$0xff]
    %v387 = vld [vmem:[#allocation6 + $0xb0] sm:$0xff]
    %v388 = vld [vmem:[#allocation6 + $0xb8] sm:$0xff]
    %v389 = vld [vmem:[#allocation6 + $0xc0] sm:$0xff]
    %v390 = vld [vmem:[#allocation6 + $0xc8] sm:$0xff]
    %v391 = vld [vmem:[#allocation6 + $0xd0] sm:$0xff]
    %v392 = vld [vmem:[#allocation6 + $0xd8] sm:$0xff]
    %v393 = vld [vmem:[#allocation6 + $0xe0] sm:$0xff]
    %v394 = vld [vmem:[#allocation6 + $0xe8] sm:$0xff]
    %v395 = vld [vmem:[#allocation6 + $0xf0] sm:$0xff]
    %v396 = vld [vmem:[#allocation6 + $0xf8] sm:$0xff]
    %v429 = vunpack.c.l.b16 %v365
    %v430 = vunpack.c.h.b16 %v365
    %v431 = vunpack.c.l.b16 %v366
    %v432 = vunpack.c.h.b16 %v366
    %v433 = vunpack.c.l.b16 %v367
    %v434 = vunpack.c.h.b16 %v367
    %v435 = vunpack.c.l.b16 %v368
    %v436 = vunpack.c.h.b16 %v368
    %v437 = vunpack.c.l.b16 %v369
    %v438 = vunpack.c.h.b16 %v369
    %v439 = vunpack.c.l.b16 %v370
    %v440 = vunpack.c.h.b16 %v370
    %v441 = vunpack.c.l.b16 %v371
    %v442 = vunpack.c.h.b16 %v371
    %v443 = vunpack.c.l.b16 %v372
    %v444 = vunpack.c.h.b16 %v372
    %v445 = vunpack.c.l.b16 %v373
    %v446 = vunpack.c.h.b16 %v373
    %v447 = vunpack.c.l.b16 %v374
    %v448 = vunpack.c.h.b16 %v374
    %v449 = vunpack.c.l.b16 %v375
    %v450 = vunpack.c.h.b16 %v375
    %v451 = vunpack.c.l.b16 %v376
    %v452 = vunpack.c.h.b16 %v376
    %v453 = vunpack.c.l.b16 %v377
    %v454 = vunpack.c.h.b16 %v377
    %v455 = vunpack.c.l.b16 %v378
    %v456 = vunpack.c.h.b16 %v378
    %v457 = vunpack.c.l.b16 %v379
    %v458 = vunpack.c.h.b16 %v379
    %v459 = vunpack.c.l.b16 %v380
    %v460 = vunpack.c.h.b16 %v380
    %v461 = vunpack.c.l.b16 %v381
    %v462 = vunpack.c.h.b16 %v381
    %v463 = vunpack.c.l.b16 %v382
    %v464 = vunpack.c.h.b16 %v382
    %v465 = vunpack.c.l.b16 %v383
    %v466 = vunpack.c.h.b16 %v383
    %v467 = vunpack.c.l.b16 %v384
    %v468 = vunpack.c.h.b16 %v384
    %v469 = vunpack.c.l.b16 %v385
    %v470 = vunpack.c.h.b16 %v385
    %v471 = vunpack.c.l.b16 %v386
    %v472 = vunpack.c.h.b16 %v386
    %v473 = vunpack.c.l.b16 %v387
    %v474 = vunpack.c.h.b16 %v387
    %v475 = vunpack.c.l.b16 %v388
    %v476 = vunpack.c.h.b16 %v388
    %v477 = vunpack.c.l.b16 %v389
    %v478 = vunpack.c.h.b16 %v389
    %v479 = vunpack.c.l.b16 %v390
    %v480 = vunpack.c.h.b16 %v390
    %v481 = vunpack.c.l.b16 %v391
    %v482 = vunpack.c.h.b16 %v391
    %v483 = vunpack.c.l.b16 %v392
    %v484 = vunpack.c.h.b16 %v392
    %v485 = vunpack.c.l.b16 %v393
    %v486 = vunpack.c.h.b16 %v393
    %v487 = vunpack.c.l.b16 %v394
    %v488 = vunpack.c.h.b16 %v394
    %v489 = vunpack.c.l.b16 %v395
    %v490 = vunpack.c.h.b16 %v395
    %v491 = vunpack.c.l.b16 %v396
    %v492 = vunpack.c.h.b16 %v396
    %v493 = vpack.c.b16 %v433, %v429
    %v494 = vpack.c.b16 %v434, %v430
    %v495 = vpack.c.b16 %v435, %v431
    %v496 = vpack.c.b16 %v436, %v432
    %v497 = vpack.c.b16 %v441, %v437
    %v498 = vpack.c.b16 %v442, %v438
    %v499 = vpack.c.b16 %v443, %v439
    %v500 = vpack.c.b16 %v444, %v440
    %v501 = vpack.c.b16 %v449, %v445
    %v502 = vpack.c.b16 %v450, %v446
    %v503 = vpack.c.b16 %v451, %v447
    %v504 = vpack.c.b16 %v452, %v448
    %v505 = vpack.c.b16 %v457, %v453
    %v506 = vpack.c.b16 %v458, %v454
    %v507 = vpack.c.b16 %v459, %v455
    %v508 = vpack.c.b16 %v460, %v456
    %v509 = vpack.c.b16 %v465, %v461
    %v510 = vpack.c.b16 %v466, %v462
    %v511 = vpack.c.b16 %v467, %v463
    %v512 = vpack.c.b16 %v468, %v464
    %v513 = vpack.c.b16 %v473, %v469
    %v514 = vpack.c.b16 %v474, %v470
    %v515 = vpack.c.b16 %v475, %v471
    %v516 = vpack.c.b16 %v476, %v472
    %v517 = vpack.c.b16 %v481, %v477
    %v518 = vpack.c.b16 %v482, %v478
    %v519 = vpack.c.b16 %v483, %v479
    %v520 = vpack.c.b16 %v484, %v480
    %v521 = vpack.c.b16 %v489, %v485
    %v522 = vpack.c.b16 %v490, %v486
    %v523 = vpack.c.b16 %v491, %v487
    %v524 = vpack.c.b16 %v492, %v488
    %557 = vmatprep.subr.bf16.mxu0 %v494
    %558 = vmatpush1.bf16.msra.mxu0 %v493
    %559 = vmatprep.subr.bf16.mxu0 %v498
    %560 = vmatpush1.bf16.msra.mxu0 %v497
    %561 = vmatprep.subr.bf16.mxu0 %v502
    %562 = vmatpush1.bf16.msra.mxu0 %v501
    %563 = vmatprep.subr.bf16.mxu0 %v506
    %564 = vmatpush1.bf16.msra.mxu0 %v505
    %565 = vmatprep.subr.bf16.mxu0 %v510
    %566 = vmatpush1.bf16.msra.mxu0 %v509
    %567 = vmatprep.subr.bf16.mxu0 %v514
    %568 = vmatpush1.bf16.msra.mxu0 %v513
    %569 = vmatprep.subr.bf16.mxu0 %v518
    %570 = vmatpush1.bf16.msra.mxu0 %v517
    %571 = vmatprep.subr.bf16.mxu0 %v522
    %572 = vmatpush1.bf16.msra.mxu0 %v521
    %573 = vmatprep.subr.bf16.mxu0 0
    %574 = vmatpush1.bf16.msra.mxu0 0
    %575 = vmatprep.subr.bf16.mxu0 0
    %576 = vmatpush1.bf16.msra.mxu0 0
    %577 = vmatprep.subr.bf16.mxu0 0
    %578 = vmatpush1.bf16.msra.mxu0 0
    %579 = vmatprep.subr.bf16.mxu0 0
    %580 = vmatpush1.bf16.msra.mxu0 0
    %581 = vmatprep.subr.bf16.mxu0 0
    %582 = vmatpush1.bf16.msra.mxu0 0
    %583 = vmatprep.subr.bf16.mxu0 0
    %584 = vmatpush1.bf16.msra.mxu0 0
    %585 = vmatprep.subr.bf16.mxu0 0
    %586 = vmatpush1.bf16.msra.mxu0 0
    %587 = vmatprep.subr.bf16.mxu0 0
    %588 = vmatpush1.bf16.msra.mxu0 0
    %589 = vmatprep.mubr.bf16.mxu0 0
    %590 = vmatmul.mubr.bf16.gmra.mrb[0].mxu0 %v364
    %v591 = vpop.f32.mrb[0].mxu0
    %v592 = vadd.f32 0.0, %v591
    %v593 = vpop.f32.mrb[0].mxu0
    %v594 = vadd.f32 0.0, %v593
    %v595 = vpop.f32.mrb[0].mxu0
    %v596 = vpop.f32.mrb[0].mxu0
    %597 = vdwg.mxu0
    %598 = vmatprep.subr.bf16.mxu0 %v496
    %599 = vmatpush1.bf16.msra.mxu0 %v495
    %600 = vmatprep.subr.bf16.mxu0 %v500
    %601 = vmatpush1.bf16.msra.mxu0 %v499
    %602 = vmatprep.subr.bf16.mxu0 %v504
    %603 = vmatpush1.bf16.msra.mxu0 %v503
    %604 = vmatprep.subr.bf16.mxu0 %v508
    %605 = vmatpush1.bf16.msra.mxu0 %v507
    %606 = vmatprep.subr.bf16.mxu0 %v512
    %607 = vmatpush1.bf16.msra.mxu0 %v511
    %608 = vmatprep.subr.bf16.mxu0 %v516
    %609 = vmatpush1.bf16.msra.mxu0 %v515
    %610 = vmatprep.subr.bf16.mxu0 %v520
    %611 = vmatpush1.bf16.msra.mxu0 %v519
    %612 = vmatprep.subr.bf16.mxu0 %v524
    %613 = vmatpush1.bf16.msra.mxu0 %v523
    %614 = vmatprep.subr.bf16.mxu0 0
    %615 = vmatpush1.bf16.msra.mxu0 0
    %616 = vmatprep.subr.bf16.mxu0 0
    %617 = vmatpush1.bf16.msra.mxu0 0
    %618 = vmatprep.subr.bf16.mxu0 0
    %619 = vmatpush1.bf16.msra.mxu0 0
    %620 = vmatprep.subr.bf16.mxu0 0
    %621 = vmatpush1.bf16.msra.mxu0 0
    %622 = vmatprep.subr.bf16.mxu0 0
    %623 = vmatpush1.bf16.msra.mxu0 0
    %624 = vmatprep.subr.bf16.mxu0 0
    %625 = vmatpush1.bf16.msra.mxu0 0
    %626 = vmatprep.subr.bf16.mxu0 0
    %627 = vmatpush1.bf16.msra.mxu0 0
    %628 = vmatprep.subr.bf16.mxu0 0
    %629 = vmatpush1.bf16.msra.mxu0 0
    %630 = vmatprep.mubr.bf16.mxu0 0
    %631 = vmatmul.mubr.bf16.gmra.mrb[0].mxu0 %v364
    %v632 = vpop.f32.mrb[0].mxu0
    %v633 = vadd.f32 0.0, %v632
    %v634 = vpop.f32.mrb[0].mxu0
    %v635 = vadd.f32 0.0, %v634
    %v636 = vpop.f32.mrb[0].mxu0
    %v637 = vpop.f32.mrb[0].mxu0
    %638 = vdwg.mxu0
    %s639 = scalar_lea.vmem [#allocation4], 32
    %v640 = vld [vmem:[%s639] sm:$0xff]
    %v641 = vld [vmem:[%s639 + $0x8] sm:$0xff]
    %v642 = vld [vmem:[%s639 + $0x10] sm:$0xff]
    %v643 = vld [vmem:[%s639 + $0x18] sm:$0xff]
    %v644 = vadd.f32 %v640, %v592
    %v645 = vadd.f32 %v641, %v594
    %v646 = vadd.f32 %v642, %v633
    %v647 = vadd.f32 %v643, %v635
    %v648 = vxor.u32 %v644, 2147483648
    %v649 = vmul.f32 %v648, 1.442695
    %v650 = vpow.pop %v649
    %v651 = vadd.f32 %v650, 1.0
    %v652 = vrcp.pop %v651
    %v653 = vmul.f32 1.0, %v652
    %v654 = vxor.u32 %v645, 2147483648
    %v655 = vmul.f32 %v654, 1.442695
    %v656 = vpow.pop %v655
    %v657 = vadd.f32 %v656, 1.0
    %v658 = vrcp.pop %v657
    %v659 = vmul.f32 1.0, %v658
    %v660 = vtanh.pop %v646
    %v661 = vxor.u32 %v647, 2147483648
    %v662 = vmul.f32 %v661, 1.442695
    %v663 = vpow.pop %v662
    %v664 = vadd.f32 %v663, 1.0
    %v665 = vrcp.pop %v664
    %v666 = vmul.f32 1.0, %v665
    %v667 = vld [vmem:[#allocation3] sm:$0xff]
    %v668 = vmul.f32 %v659, %v667
    %v669 = vmul.f32 %v653, %v660
    %v670 = vadd.f32 %v668, %v669
    %v671 = vtanh.pop %v670
    %v672 = vmul.f32 %v666, %v671
    %673 = vst [vmem:[#allocation2] sm:$0xff] %v672
    %674 = vst [vmem:[#allocation3] sm:$0xff] %v670
    %v675 = vld [vmem:[#allocation2] sm:$0xff]
    %v676 = vpack.c.bf16 %v675, %v675
    %v677 = vld [vmem:[#allocation6] sm:$0xff]
    %v678 = vld [vmem:[#allocation6 + $0x8] sm:$0xff]
    %v679 = vld [vmem:[#allocation6 + $0x10] sm:$0xff]
    %v680 = vld [vmem:[#allocation6 + $0x18] sm:$0xff]
    %v681 = vld [vmem:[#allocation6 + $0x20] sm:$0xff]
    %v682 = vld [vmem:[#allocation6 + $0x28] sm:$0xff]
    %v683 = vld [vmem:[#allocation6 + $0x30] sm:$0xff]
    %v684 = vld [vmem:[#allocation6 + $0x38] sm:$0xff]
    %v685 = vld [vmem:[#allocation6 + $0x40] sm:$0xff]
    %v686 = vld [vmem:[#allocation6 + $0x48] sm:$0xff]
    %v687 = vld [vmem:[#allocation6 + $0x50] sm:$0xff]
    %v688 = vld [vmem:[#allocation6 + $0x58] sm:$0xff]
    %v689 = vld [vmem:[#allocation6 + $0x60] sm:$0xff]
    %v690 = vld [vmem:[#allocation6 + $0x68] sm:$0xff]
    %v691 = vld [vmem:[#allocation6 + $0x70] sm:$0xff]
    %v692 = vld [vmem:[#allocation6 + $0x78] sm:$0xff]
    %v693 = vld [vmem:[#allocation6 + $0x80] sm:$0xff]
    %v694 = vld [vmem:[#allocation6 + $0x88] sm:$0xff]
    %v695 = vld [vmem:[#allocation6 + $0x90] sm:$0xff]
    %v696 = vld [vmem:[#allocation6 + $0x98] sm:$0xff]
    %v697 = vld [vmem:[#allocation6 + $0xa0] sm:$0xff]
    %v698 = vld [vmem:[#allocation6 + $0xa8] sm:$0xff]
    %v699 = vld [vmem:[#allocation6 + $0xb0] sm:$0xff]
    %v700 = vld [vmem:[#allocation6 + $0xb8] sm:$0xff]
    %v701 = vld [vmem:[#allocation6 + $0xc0] sm:$0xff]
    %v702 = vld [vmem:[#allocation6 + $0xc8] sm:$0xff]
    %v703 = vld [vmem:[#allocation6 + $0xd0] sm:$0xff]
    %v704 = vld [vmem:[#allocation6 + $0xd8] sm:$0xff]
    %v705 = vld [vmem:[#allocation6 + $0xe0] sm:$0xff]
    %v706 = vld [vmem:[#allocation6 + $0xe8] sm:$0xff]
    %v707 = vld [vmem:[#allocation6 + $0xf0] sm:$0xff]
    %v708 = vld [vmem:[#allocation6 + $0xf8] sm:$0xff]
    %v741 = vunpack.c.l.b16 %v677
    %v742 = vunpack.c.h.b16 %v677
    %v743 = vunpack.c.l.b16 %v678
    %v744 = vunpack.c.h.b16 %v678
    %v745 = vunpack.c.l.b16 %v679
    %v746 = vunpack.c.h.b16 %v679
    %v747 = vunpack.c.l.b16 %v680
    %v748 = vunpack.c.h.b16 %v680
    %v749 = vunpack.c.l.b16 %v681
    %v750 = vunpack.c.h.b16 %v681
    %v751 = vunpack.c.l.b16 %v682
    %v752 = vunpack.c.h.b16 %v682
    %v753 = vunpack.c.l.b16 %v683
    %v754 = vunpack.c.h.b16 %v683
    %v755 = vunpack.c.l.b16 %v684
    %v756 = vunpack.c.h.b16 %v684
    %v757 = vunpack.c.l.b16 %v685
    %v758 = vunpack.c.h.b16 %v685
    %v759 = vunpack.c.l.b16 %v686
    %v760 = vunpack.c.h.b16 %v686
    %v761 = vunpack.c.l.b16 %v687
    %v762 = vunpack.c.h.b16 %v687
    %v763 = vunpack.c.l.b16 %v688
    %v764 = vunpack.c.h.b16 %v688
    %v765 = vunpack.c.l.b16 %v689
    %v766 = vunpack.c.h.b16 %v689
    %v767 = vunpack.c.l.b16 %v690
    %v768 = vunpack.c.h.b16 %v690
    %v769 = vunpack.c.l.b16 %v691
    %v770 = vunpack.c.h.b16 %v691
    %v771 = vunpack.c.l.b16 %v692
    %v772 = vunpack.c.h.b16 %v692
    %v773 = vunpack.c.l.b16 %v693
    %v774 = vunpack.c.h.b16 %v693
    %v775 = vunpack.c.l.b16 %v694
    %v776 = vunpack.c.h.b16 %v694
    %v777 = vunpack.c.l.b16 %v695
    %v778 = vunpack.c.h.b16 %v695
    %v779 = vunpack.c.l.b16 %v696
    %v780 = vunpack.c.h.b16 %v696
    %v781 = vunpack.c.l.b16 %v697
    %v782 = vunpack.c.h.b16 %v697
    %v783 = vunpack.c.l.b16 %v698
    %v784 = vunpack.c.h.b16 %v698
    %v785 = vunpack.c.l.b16 %v699
    %v786 = vunpack.c.h.b16 %v699
    %v787 = vunpack.c.l.b16 %v700
    %v788 = vunpack.c.h.b16 %v700
    %v789 = vunpack.c.l.b16 %v701
    %v790 = vunpack.c.h.b16 %v701
    %v791 = vunpack.c.l.b16 %v702
    %v792 = vunpack.c.h.b16 %v702
    %v793 = vunpack.c.l.b16 %v703
    %v794 = vunpack.c.h.b16 %v703
    %v795 = vunpack.c.l.b16 %v704
    %v796 = vunpack.c.h.b16 %v704
    %v797 = vunpack.c.l.b16 %v705
    %v798 = vunpack.c.h.b16 %v705
    %v799 = vunpack.c.l.b16 %v706
    %v800 = vunpack.c.h.b16 %v706
    %v801 = vunpack.c.l.b16 %v707
    %v802 = vunpack.c.h.b16 %v707
    %v803 = vunpack.c.l.b16 %v708
    %v804 = vunpack.c.h.b16 %v708
    %v805 = vpack.c.b16 %v745, %v741
    %v806 = vpack.c.b16 %v746, %v742
    %v807 = vpack.c.b16 %v747, %v743
    %v808 = vpack.c.b16 %v748, %v744
    %v809 = vpack.c.b16 %v753, %v749
    %v810 = vpack.c.b16 %v754, %v750
    %v811 = vpack.c.b16 %v755, %v751
    %v812 = vpack.c.b16 %v756, %v752
    %v813 = vpack.c.b16 %v761, %v757
    %v814 = vpack.c.b16 %v762, %v758
    %v815 = vpack.c.b16 %v763, %v759
    %v816 = vpack.c.b16 %v764, %v760
    %v817 = vpack.c.b16 %v769, %v765
    %v818 = vpack.c.b16 %v770, %v766
    %v819 = vpack.c.b16 %v771, %v767
    %v820 = vpack.c.b16 %v772, %v768
    %v821 = vpack.c.b16 %v777, %v773
    %v822 = vpack.c.b16 %v778, %v774
    %v823 = vpack.c.b16 %v779, %v775
    %v824 = vpack.c.b16 %v780, %v776
    %v825 = vpack.c.b16 %v785, %v781
    %v826 = vpack.c.b16 %v786, %v782
    %v827 = vpack.c.b16 %v787, %v783
    %v828 = vpack.c.b16 %v788, %v784
    %v829 = vpack.c.b16 %v793, %v789
    %v830 = vpack.c.b16 %v794, %v790
    %v831 = vpack.c.b16 %v795, %v791
    %v832 = vpack.c.b16 %v796, %v792
    %v833 = vpack.c.b16 %v801, %v797
    %v834 = vpack.c.b16 %v802, %v798
    %v835 = vpack.c.b16 %v803, %v799
    %v836 = vpack.c.b16 %v804, %v800
    %869 = vmatprep.subr.bf16.mxu0 %v806
    %870 = vmatpush1.bf16.msra.mxu0 %v805
    %871 = vmatprep.subr.bf16.mxu0 %v810
    %872 = vmatpush1.bf16.msra.mxu0 %v809
    %873 = vmatprep.subr.bf16.mxu0 %v814
    %874 = vmatpush1.bf16.msra.mxu0 %v813
    %875 = vmatprep.subr.bf16.mxu0 %v818
    %876 = vmatpush1.bf16.msra.mxu0 %v817
    %877 = vmatprep.subr.bf16.mxu0 %v822
    %878 = vmatpush1.bf16.msra.mxu0 %v821
    %879 = vmatprep.subr.bf16.mxu0 %v826
    %880 = vmatpush1.bf16.msra.mxu0 %v825
    %881 = vmatprep.subr.bf16.mxu0 %v830
    %882 = vmatpush1.bf16.msra.mxu0 %v829
    %883 = vmatprep.subr.bf16.mxu0 %v834
    %884 = vmatpush1.bf16.msra.mxu0 %v833
    %885 = vmatprep.subr.bf16.mxu0 0
    %886 = vmatpush1.bf16.msra.mxu0 0
    %887 = vmatprep.subr.bf16.mxu0 0
    %888 = vmatpush1.bf16.msra.mxu0 0
    %889 = vmatprep.subr.bf16.mxu0 0
    %890 = vmatpush1.bf16.msra.mxu0 0
    %891 = vmatprep.subr.bf16.mxu0 0
    %892 = vmatpush1.bf16.msra.mxu0 0
    %893 = vmatprep.subr.bf16.mxu0 0
    %894 = vmatpush1.bf16.msra.mxu0 0
    %895 = vmatprep.subr.bf16.mxu0 0
    %896 = vmatpush1.bf16.msra.mxu0 0
    %897 = vmatprep.subr.bf16.mxu0 0
    %898 = vmatpush1.bf16.msra.mxu0 0
    %899 = vmatprep.subr.bf16.mxu0 0
    %900 = vmatpush1.bf16.msra.mxu0 0
    %901 = vmatprep.mubr.bf16.mxu0 0
    %902 = vmatmul.mubr.bf16.gmra.mrb[0].mxu0 %v676
    %v903 = vpop.f32.mrb[0].mxu0
    %v904 = vadd.f32 0.0, %v903
    %v905 = vpop.f32.mrb[0].mxu0
    %v906 = vadd.f32 0.0, %v905
    %v907 = vpop.f32.mrb[0].mxu0
    %v908 = vpop.f32.mrb[0].mxu0
    %909 = vdwg.mxu0
    %910 = vmatprep.subr.bf16.mxu0 %v808
    %911 = vmatpush1.bf16.msra.mxu0 %v807
    %912 = vmatprep.subr.bf16.mxu0 %v812
    %913 = vmatpush1.bf16.msra.mxu0 %v811
    %914 = vmatprep.subr.bf16.mxu0 %v816
    %915 = vmatpush1.bf16.msra.mxu0 %v815
    %916 = vmatprep.subr.bf16.mxu0 %v820
    %917 = vmatpush1.bf16.msra.mxu0 %v819
    %918 = vmatprep.subr.bf16.mxu0 %v824
    %919 = vmatpush1.bf16.msra.mxu0 %v823
    %920 = vmatprep.subr.bf16.mxu0 %v828
    %921 = vmatpush1.bf16.msra.mxu0 %v827
    %922 = vmatprep.subr.bf16.mxu0 %v832
    %923 = vmatpush1.bf16.msra.mxu0 %v831
    %924 = vmatprep.subr.bf16.mxu0 %v836
    %925 = vmatpush1.bf16.msra.mxu0 %v835
    %926 = vmatprep.subr.bf16.mxu0 0
    %927 = vmatpush1.bf16.msra.mxu0 0
    %928 = vmatprep.subr.bf16.mxu0 0
    %929 = vmatpush1.bf16.msra.mxu0 0
    %930 = vmatprep.subr.bf16.mxu0 0
    %931 = vmatpush1.bf16.msra.mxu0 0
    %932 = vmatprep.subr.bf16.mxu0 0
    %933 = vmatpush1.bf16.msra.mxu0 0
    %934 = vmatprep.subr.bf16.mxu0 0
    %935 = vmatpush1.bf16.msra.mxu0 0
    %936 = vmatprep.subr.bf16.mxu0 0
    %937 = vmatpush1.bf16.msra.mxu0 0
    %938 = vmatprep.subr.bf16.mxu0 0
    %939 = vmatpush1.bf16.msra.mxu0 0
    %940 = vmatprep.subr.bf16.mxu0 0
    %941 = vmatpush1.bf16.msra.mxu0 0
    %942 = vmatprep.mubr.bf16.mxu0 0
    %943 = vmatmul.mubr.bf16.gmra.mrb[0].mxu0 %v676
    %v944 = vpop.f32.mrb[0].mxu0
    %v945 = vadd.f32 0.0, %v944
    %v946 = vpop.f32.mrb[0].mxu0
    %v947 = vadd.f32 0.0, %v946
    %v948 = vpop.f32.mrb[0].mxu0
    %v949 = vpop.f32.mrb[0].mxu0
    %950 = vdwg.mxu0
    %s951 = scalar_lea.vmem [#allocation4], 64
    %v952 = vld [vmem:[%s951] sm:$0xff]
    %v953 = vld [vmem:[%s951 + $0x8] sm:$0xff]
    %v954 = vld [vmem:[%s951 + $0x10] sm:$0xff]
    %v955 = vld [vmem:[%s951 + $0x18] sm:$0xff]
    %v956 = vadd.f32 %v952, %v904
    %v957 = vadd.f32 %v953, %v906
    %v958 = vadd.f32 %v954, %v945
    %v959 = vadd.f32 %v955, %v947
    %v960 = vxor.u32 %v956, 2147483648
    %v961 = vmul.f32 %v960, 1.442695
    %v962 = vpow.pop %v961
    %v963 = vadd.f32 %v962, 1.0
    %v964 = vrcp.pop %v963
    %v965 = vmul.f32 1.0, %v964
    %v966 = vxor.u32 %v957, 2147483648
    %v967 = vmul.f32 %v966, 1.442695
    %v968 = vpow.pop %v967
    %v969 = vadd.f32 %v968, 1.0
    %v970 = vrcp.pop %v969
    %v971 = vmul.f32 1.0, %v970
    %v972 = vtanh.pop %v958
    %v973 = vxor.u32 %v959, 2147483648
    %v974 = vmul.f32 %v973, 1.442695
    %v975 = vpow.pop %v974
    %v976 = vadd.f32 %v975, 1.0
    %v977 = vrcp.pop %v976
    %v978 = vmul.f32 1.0, %v977
    %v979 = vld [vmem:[#allocation3] sm:$0xff]
    %v980 = vmul.f32 %v971, %v979
    %v981 = vmul.f32 %v965, %v972
    %v982 = vadd.f32 %v980, %v981
    %v983 = vtanh.pop %v982
    %v984 = vmul.f32 %v978, %v983
    %985 = vst [vmem:[#allocation2] sm:$0xff] %v984
    %986 = vst [vmem:[#allocation3] sm:$0xff] %v982
    %v987 = vld [vmem:[#allocation2] sm:$0xff]
    %v988 = vpack.c.bf16 %v987, %v987
    %v989 = vld [vmem:[#allocation6] sm:$0xff]
    %v990 = vld [vmem:[#allocation6 + $0x8] sm:$0xff]
    %v991 = vld [vmem:[#allocation6 + $0x10] sm:$0xff]
    %v992 = vld [vmem:[#allocation6 + $0x18] sm:$0xff]
    %v993 = vld [vmem:[#allocation6 + $0x20] sm:$0xff]
    %v994 = vld [vmem:[#allocation6 + $0x28] sm:$0xff]
    %v995 = vld [vmem:[#allocation6 + $0x30] sm:$0xff]
    %v996 = vld [vmem:[#allocation6 + $0x38] sm:$0xff]
    %v997 = vld [vmem:[#allocation6 + $0x40] sm:$0xff]
    %v998 = vld [vmem:[#allocation6 + $0x48] sm:$0xff]
    %v999 = vld [vmem:[#allocation6 + $0x50] sm:$0xff]
    %v1000 = vld [vmem:[#allocation6 + $0x58] sm:$0xff]
    %v1001 = vld [vmem:[#allocation6 + $0x60] sm:$0xff]
    %v1002 = vld [vmem:[#allocation6 + $0x68] sm:$0xff]
    %v1003 = vld [vmem:[#allocation6 + $0x70] sm:$0xff]
    %v1004 = vld [vmem:[#allocation6 + $0x78] sm:$0xff]
    %v1005 = vld [vmem:[#allocation6 + $0x80] sm:$0xff]
    %v1006 = vld [vmem:[#allocation6 + $0x88] sm:$0xff]
    %v1007 = vld [vmem:[#allocation6 + $0x90] sm:$0xff]
    %v1008 = vld [vmem:[#allocation6 + $0x98] sm:$0xff]
    %v1009 = vld [vmem:[#allocation6 + $0xa0] sm:$0xff]
    %v1010 = vld [vmem:[#allocation6 + $0xa8] sm:$0xff]
    %v1011 = vld [vmem:[#allocation6 + $0xb0] sm:$0xff]
    %v1012 = vld [vmem:[#allocation6 + $0xb8] sm:$0xff]
    %v1013 = vld [vmem:[#allocation6 + $0xc0] sm:$0xff]
    %v1014 = vld [vmem:[#allocation6 + $0xc8] sm:$0xff]
    %v1015 = vld [vmem:[#allocation6 + $0xd0] sm:$0xff]
    %v1016 = vld [vmem:[#allocation6 + $0xd8] sm:$0xff]
    %v1017 = vld [vmem:[#allocation6 + $0xe0] sm:$0xff]
    %v1018 = vld [vmem:[#allocation6 + $0xe8] sm:$0xff]
    %v1019 = vld [vmem:[#allocation6 + $0xf0] sm:$0xff]
    %v1020 = vld [vmem:[#allocation6 + $0xf8] sm:$0xff]
    %v1053 = vunpack.c.l.b16 %v989
    %v1054 = vunpack.c.h.b16 %v989
    %v1055 = vunpack.c.l.b16 %v990
    %v1056 = vunpack.c.h.b16 %v990
    %v1057 = vunpack.c.l.b16 %v991
    %v1058 = vunpack.c.h.b16 %v991
    %v1059 = vunpack.c.l.b16 %v992
    %v1060 = vunpack.c.h.b16 %v992
    %v1061 = vunpack.c.l.b16 %v993
    %v1062 = vunpack.c.h.b16 %v993
    %v1063 = vunpack.c.l.b16 %v994
    %v1064 = vunpack.c.h.b16 %v994
    %v1065 = vunpack.c.l.b16 %v995
    %v1066 = vunpack.c.h.b16 %v995
    %v1067 = vunpack.c.l.b16 %v996
    %v1068 = vunpack.c.h.b16 %v996
    %v1069 = vunpack.c.l.b16 %v997
    %v1070 = vunpack.c.h.b16 %v997
    %v1071 = vunpack.c.l.b16 %v998
    %v1072 = vunpack.c.h.b16 %v998
    %v1073 = vunpack.c.l.b16 %v999
    %v1074 = vunpack.c.h.b16 %v999
    %v1075 = vunpack.c.l.b16 %v1000
    %v1076 = vunpack.c.h.b16 %v1000
    %v1077 = vunpack.c.l.b16 %v1001
    %v1078 = vunpack.c.h.b16 %v1001
    %v1079 = vunpack.c.l.b16 %v1002
    %v1080 = vunpack.c.h.b16 %v1002
    %v1081 = vunpack.c.l.b16 %v1003
    %v1082 = vunpack.c.h.b16 %v1003
    %v1083 = vunpack.c.l.b16 %v1004
    %v1084 = vunpack.c.h.b16 %v1004
    %v1085 = vunpack.c.l.b16 %v1005
    %v1086 = vunpack.c.h.b16 %v1005
    %v1087 = vunpack.c.l.b16 %v1006
    %v1088 = vunpack.c.h.b16 %v1006
    %v1089 = vunpack.c.l.b16 %v1007
    %v1090 = vunpack.c.h.b16 %v1007
    %v1091 = vunpack.c.l.b16 %v1008
    %v1092 = vunpack.c.h.b16 %v1008
    %v1093 = vunpack.c.l.b16 %v1009
    %v1094 = vunpack.c.h.b16 %v1009
    %v1095 = vunpack.c.l.b16 %v1010
    %v1096 = vunpack.c.h.b16 %v1010
    %v1097 = vunpack.c.l.b16 %v1011
    %v1098 = vunpack.c.h.b16 %v1011
    %v1099 = vunpack.c.l.b16 %v1012
    %v1100 = vunpack.c.h.b16 %v1012
    %v1101 = vunpack.c.l.b16 %v1013
    %v1102 = vunpack.c.h.b16 %v1013
    %v1103 = vunpack.c.l.b16 %v1014
    %v1104 = vunpack.c.h.b16 %v1014
    %v1105 = vunpack.c.l.b16 %v1015
    %v1106 = vunpack.c.h.b16 %v1015
    %v1107 = vunpack.c.l.b16 %v1016
    %v1108 = vunpack.c.h.b16 %v1016
    %v1109 = vunpack.c.l.b16 %v1017
    %v1110 = vunpack.c.h.b16 %v1017
    %v1111 = vunpack.c.l.b16 %v1018
    %v1112 = vunpack.c.h.b16 %v1018
    %v1113 = vunpack.c.l.b16 %v1019
    %v1114 = vunpack.c.h.b16 %v1019
    %v1115 = vunpack.c.l.b16 %v1020
    %v1116 = vunpack.c.h.b16 %v1020
    %v1117 = vpack.c.b16 %v1057, %v1053
    %v1118 = vpack.c.b16 %v1058, %v1054
    %v1119 = vpack.c.b16 %v1059, %v1055
    %v1120 = vpack.c.b16 %v1060, %v1056
    %v1121 = vpack.c.b16 %v1065, %v1061
    %v1122 = vpack.c.b16 %v1066, %v1062
    %v1123 = vpack.c.b16 %v1067, %v1063
    %v1124 = vpack.c.b16 %v1068, %v1064
    %v1125 = vpack.c.b16 %v1073, %v1069
    %v1126 = vpack.c.b16 %v1074, %v1070
    %v1127 = vpack.c.b16 %v1075, %v1071
    %v1128 = vpack.c.b16 %v1076, %v1072
    %v1129 = vpack.c.b16 %v1081, %v1077
    %v1130 = vpack.c.b16 %v1082, %v1078
    %v1131 = vpack.c.b16 %v1083, %v1079
    %v1132 = vpack.c.b16 %v1084, %v1080
    %v1133 = vpack.c.b16 %v1089, %v1085
    %v1134 = vpack.c.b16 %v1090, %v1086
    %v1135 = vpack.c.b16 %v1091, %v1087
    %v1136 = vpack.c.b16 %v1092, %v1088
    %v1137 = vpack.c.b16 %v1097, %v1093
    %v1138 = vpack.c.b16 %v1098, %v1094
    %v1139 = vpack.c.b16 %v1099, %v1095
    %v1140 = vpack.c.b16 %v1100, %v1096
    %v1141 = vpack.c.b16 %v1105, %v1101
    %v1142 = vpack.c.b16 %v1106, %v1102
    %v1143 = vpack.c.b16 %v1107, %v1103
    %v1144 = vpack.c.b16 %v1108, %v1104
    %v1145 = vpack.c.b16 %v1113, %v1109
    %v1146 = vpack.c.b16 %v1114, %v1110
    %v1147 = vpack.c.b16 %v1115, %v1111
    %v1148 = vpack.c.b16 %v1116, %v1112
    %1181 = vmatprep.subr.bf16.mxu0 %v1118
    %1182 = vmatpush1.bf16.msra.mxu0 %v1117
    %1183 = vmatprep.subr.bf16.mxu0 %v1122
    %1184 = vmatpush1.bf16.msra.mxu0 %v1121
    %1185 = vmatprep.subr.bf16.mxu0 %v1126
    %1186 = vmatpush1.bf16.msra.mxu0 %v1125
    %1187 = vmatprep.subr.bf16.mxu0 %v1130
    %1188 = vmatpush1.bf16.msra.mxu0 %v1129
    %1189 = vmatprep.subr.bf16.mxu0 %v1134
    %1190 = vmatpush1.bf16.msra.mxu0 %v1133
    %1191 = vmatprep.subr.bf16.mxu0 %v1138
    %1192 = vmatpush1.bf16.msra.mxu0 %v1137
    %1193 = vmatprep.subr.bf16.mxu0 %v1142
    %1194 = vmatpush1.bf16.msra.mxu0 %v1141
    %1195 = vmatprep.subr.bf16.mxu0 %v1146
    %1196 = vmatpush1.bf16.msra.mxu0 %v1145
    %1197 = vmatprep.subr.bf16.mxu0 0
    %1198 = vmatpush1.bf16.msra.mxu0 0
    %1199 = vmatprep.subr.bf16.mxu0 0
    %1200 = vmatpush1.bf16.msra.mxu0 0
    %1201 = vmatprep.subr.bf16.mxu0 0
    %1202 = vmatpush1.bf16.msra.mxu0 0
    %1203 = vmatprep.subr.bf16.mxu0 0
    %1204 = vmatpush1.bf16.msra.mxu0 0
    %1205 = vmatprep.subr.bf16.mxu0 0
    %1206 = vmatpush1.bf16.msra.mxu0 0
    %1207 = vmatprep.subr.bf16.mxu0 0
    %1208 = vmatpush1.bf16.msra.mxu0 0
    %1209 = vmatprep.subr.bf16.mxu0 0
    %1210 = vmatpush1.bf16.msra.mxu0 0
    %1211 = vmatprep.subr.bf16.mxu0 0
    %1212 = vmatpush1.bf16.msra.mxu0 0
    %1213 = vmatprep.mubr.bf16.mxu0 0
    %1214 = vmatmul.mubr.bf16.gmra.mrb[0].mxu0 %v988
    %v1215 = vpop.f32.mrb[0].mxu0
    %v1216 = vadd.f32 0.0, %v1215
    %v1217 = vpop.f32.mrb[0].mxu0
    %v1218 = vadd.f32 0.0, %v1217
    %v1219 = vpop.f32.mrb[0].mxu0
    %v1220 = vpop.f32.mrb[0].mxu0
    %1221 = vdwg.mxu0
    %1222 = vmatprep.subr.bf16.mxu0 %v1120
    %1223 = vmatpush1.bf16.msra.mxu0 %v1119
    %1224 = vmatprep.subr.bf16.mxu0 %v1124
    %1225 = vmatpush1.bf16.msra.mxu0 %v1123
    %1226 = vmatprep.subr.bf16.mxu0 %v1128
    %1227 = vmatpush1.bf16.msra.mxu0 %v1127
    %1228 = vmatprep.subr.bf16.mxu0 %v1132
    %1229 = vmatpush1.bf16.msra.mxu0 %v1131
    %1230 = vmatprep.subr.bf16.mxu0 %v1136
    %1231 = vmatpush1.bf16.msra.mxu0 %v1135
    %1232 = vmatprep.subr.bf16.mxu0 %v1140
    %1233 = vmatpush1.bf16.msra.mxu0 %v1139
    %1234 = vmatprep.subr.bf16.mxu0 %v1144
    %1235 = vmatpush1.bf16.msra.mxu0 %v1143
    %1236 = vmatprep.subr.bf16.mxu0 %v1148
    %1237 = vmatpush1.bf16.msra.mxu0 %v1147
    %1238 = vmatprep.subr.bf16.mxu0 0
    %1239 = vmatpush1.bf16.msra.mxu0 0
    %1240 = vmatprep.subr.bf16.mxu0 0
    %1241 = vmatpush1.bf16.msra.mxu0 0
    %1242 = vmatprep.subr.bf16.mxu0 0
    %1243 = vmatpush1.bf16.msra.mxu0 0
    %1244 = vmatprep.subr.bf16.mxu0 0
    %1245 = vmatpush1.bf16.msra.mxu0 0
    %1246 = vmatprep.subr.bf16.mxu0 0
    %1247 = vmatpush1.bf16.msra.mxu0 0
    %1248 = vmatprep.subr.bf16.mxu0 0
    %1249 = vmatpush1.bf16.msra.mxu0 0
    %1250 = vmatprep.subr.bf16.mxu0 0
    %1251 = vmatpush1.bf16.msra.mxu0 0
    %1252 = vmatprep.subr.bf16.mxu0 0
    %1253 = vmatpush1.bf16.msra.mxu0 0
    %1254 = vmatprep.mubr.bf16.mxu0 0
    %1255 = vmatmul.mubr.bf16.gmra.mrb[0].mxu0 %v988
    %v1256 = vpop.f32.mrb[0].mxu0
    %v1257 = vadd.f32 0.0, %v1256
    %v1258 = vpop.f32.mrb[0].mxu0
    %v1259 = vadd.f32 0.0, %v1258
    %v1260 = vpop.f32.mrb[0].mxu0
    %v1261 = vpop.f32.mrb[0].mxu0
    %1262 = vdwg.mxu0
    %s1263 = scalar_lea.vmem [#allocation4], 96
    %v1264 = vld [vmem:[%s1263] sm:$0xff]
    %v1265 = vld [vmem:[%s1263 + $0x8] sm:$0xff]
    %v1266 = vld [vmem:[%s1263 + $0x10] sm:$0xff]
    %v1267 = vld [vmem:[%s1263 + $0x18] sm:$0xff]
    %v1268 = vadd.f32 %v1264, %v1216
    %v1269 = vadd.f32 %v1265, %v1218
    %v1270 = vadd.f32 %v1266, %v1257
    %v1271 = vadd.f32 %v1267, %v1259
    %v1272 = vxor.u32 %v1268, 2147483648
    %v1273 = vmul.f32 %v1272, 1.442695
    %v1274 = vpow.pop %v1273
    %v1275 = vadd.f32 %v1274, 1.0
    %v1276 = vrcp.pop %v1275
    %v1277 = vmul.f32 1.0, %v1276
    %v1278 = vxor.u32 %v1269, 2147483648
    %v1279 = vmul.f32 %v1278, 1.442695
    %v1280 = vpow.pop %v1279
    %v1281 = vadd.f32 %v1280, 1.0
    %v1282 = vrcp.pop %v1281
    %v1283 = vmul.f32 1.0, %v1282
    %v1284 = vtanh.pop %v1270
    %v1285 = vxor.u32 %v1271, 2147483648
    %v1286 = vmul.f32 %v1285, 1.442695
    %v1287 = vpow.pop %v1286
    %v1288 = vadd.f32 %v1287, 1.0
    %v1289 = vrcp.pop %v1288
    %v1290 = vmul.f32 1.0, %v1289
    %v1291 = vld [vmem:[#allocation3] sm:$0xff]
    %v1292 = vmul.f32 %v1283, %v1291
    %v1293 = vmul.f32 %v1277, %v1284
    %v1294 = vadd.f32 %v1292, %v1293
    %v1295 = vtanh.pop %v1294
    %v1296 = vmul.f32 %v1290, %v1295
    %1297 = vst [vmem:[#allocation2] sm:$0xff] %v1296
    %1298 = vst [vmem:[#allocation3] sm:$0xff] %v1294
    %v1299 = vld [vmem:[#allocation2] sm:$0xff]
    %v1300 = vpack.c.bf16 %v1299, %v1299
    %v1301 = vld [vmem:[#allocation6] sm:$0xff]
    %v1302 = vld [vmem:[#allocation6 + $0x8] sm:$0xff]
    %v1303 = vld [vmem:[#allocation6 + $0x10] sm:$0xff]
    %v1304 = vld [vmem:[#allocation6 + $0x18] sm:$0xff]
    %v1305 = vld [vmem:[#allocation6 + $0x20] sm:$0xff]
    %v1306 = vld [vmem:[#allocation6 + $0x28] sm:$0xff]
    %v1307 = vld [vmem:[#allocation6 + $0x30] sm:$0xff]
    %v1308 = vld [vmem:[#allocation6 + $0x38] sm:$0xff]
    %v1309 = vld [vmem:[#allocation6 + $0x40] sm:$0xff]
    %v1310 = vld [vmem:[#allocation6 + $0x48] sm:$0xff]
    %v1311 = vld [vmem:[#allocation6 + $0x50] sm:$0xff]
    %v1312 = vld [vmem:[#allocation6 + $0x58] sm:$0xff]
    %v1313 = vld [vmem:[#allocation6 + $0x60] sm:$0xff]
    %v1314 = vld [vmem:[#allocation6 + $0x68] sm:$0xff]
    %v1315 = vld [vmem:[#allocation6 + $0x70] sm:$0xff]
    %v1316 = vld [vmem:[#allocation6 + $0x78] sm:$0xff]
    %v1317 = vld [vmem:[#allocation6 + $0x80] sm:$0xff]
    %v1318 = vld [vmem:[#allocation6 + $0x88] sm:$0xff]
    %v1319 = vld [vmem:[#allocation6 + $0x90] sm:$0xff]
    %v1320 = vld [vmem:[#allocation6 + $0x98] sm:$0xff]
    %v1321 = vld [vmem:[#allocation6 + $0xa0] sm:$0xff]
    %v1322 = vld [vmem:[#allocation6 + $0xa8] sm:$0xff]
    %v1323 = vld [vmem:[#allocation6 + $0xb0] sm:$0xff]
    %v1324 = vld [vmem:[#allocation6 + $0xb8] sm:$0xff]
    %v1325 = vld [vmem:[#allocation6 + $0xc0] sm:$0xff]
    %v1326 = vld [vmem:[#allocation6 + $0xc8] sm:$0xff]
    %v1327 = vld [vmem:[#allocation6 + $0xd0] sm:$0xff]
    %v1328 = vld [vmem:[#allocation6 + $0xd8] sm:$0xff]
    %v1329 = vld [vmem:[#allocation6 + $0xe0] sm:$0xff]
    %v1330 = vld [vmem:[#allocation6 + $0xe8] sm:$0xff]
    %v1331 = vld [vmem:[#allocation6 + $0xf0] sm:$0xff]
    %v1332 = vld [vmem:[#allocation6 + $0xf8] sm:$0xff]
    %v1365 = vunpack.c.l.b16 %v1301
    %v1366 = vunpack.c.h.b16 %v1301
    %v1367 = vunpack.c.l.b16 %v1302
    %v1368 = vunpack.c.h.b16 %v1302
    %v1369 = vunpack.c.l.b16 %v1303
    %v1370 = vunpack.c.h.b16 %v1303
    %v1371 = vunpack.c.l.b16 %v1304
    %v1372 = vunpack.c.h.b16 %v1304
    %v1373 = vunpack.c.l.b16 %v1305
    %v1374 = vunpack.c.h.b16 %v1305
    %v1375 = vunpack.c.l.b16 %v1306
    %v1376 = vunpack.c.h.b16 %v1306
    %v1377 = vunpack.c.l.b16 %v1307
    %v1378 = vunpack.c.h.b16 %v1307
    %v1379 = vunpack.c.l.b16 %v1308
    %v1380 = vunpack.c.h.b16 %v1308
    %v1381 = vunpack.c.l.b16 %v1309
    %v1382 = vunpack.c.h.b16 %v1309
    %v1383 = vunpack.c.l.b16 %v1310
    %v1384 = vunpack.c.h.b16 %v1310
    %v1385 = vunpack.c.l.b16 %v1311
    %v1386 = vunpack.c.h.b16 %v1311
    %v1387 = vunpack.c.l.b16 %v1312
    %v1388 = vunpack.c.h.b16 %v1312
    %v1389 = vunpack.c.l.b16 %v1313
    %v1390 = vunpack.c.h.b16 %v1313
    %v1391 = vunpack.c.l.b16 %v1314
    %v1392 = vunpack.c.h.b16 %v1314
    %v1393 = vunpack.c.l.b16 %v1315
    %v1394 = vunpack.c.h.b16 %v1315
    %v1395 = vunpack.c.l.b16 %v1316
    %v1396 = vunpack.c.h.b16 %v1316
    %v1397 = vunpack.c.l.b16 %v1317
    %v1398 = vunpack.c.h.b16 %v1317
    %v1399 = vunpack.c.l.b16 %v1318
    %v1400 = vunpack.c.h.b16 %v1318
    %v1401 = vunpack.c.l.b16 %v1319
    %v1402 = vunpack.c.h.b16 %v1319
    %v1403 = vunpack.c.l.b16 %v1320
    %v1404 = vunpack.c.h.b16 %v1320
    %v1405 = vunpack.c.l.b16 %v1321
    %v1406 = vunpack.c.h.b16 %v1321
    %v1407 = vunpack.c.l.b16 %v1322
    %v1408 = vunpack.c.h.b16 %v1322
    %v1409 = vunpack.c.l.b16 %v1323
    %v1410 = vunpack.c.h.b16 %v1323
    %v1411 = vunpack.c.l.b16 %v1324
    %v1412 = vunpack.c.h.b16 %v1324
    %v1413 = vunpack.c.l.b16 %v1325
    %v1414 = vunpack.c.h.b16 %v1325
    %v1415 = vunpack.c.l.b16 %v1326
    %v1416 = vunpack.c.h.b16 %v1326
    %v1417 = vunpack.c.l.b16 %v1327
    %v1418 = vunpack.c.h.b16 %v1327
    %v1419 = vunpack.c.l.b16 %v1328
    %v1420 = vunpack.c.h.b16 %v1328
    %v1421 = vunpack.c.l.b16 %v1329
    %v1422 = vunpack.c.h.b16 %v1329
    %v1423 = vunpack.c.l.b16 %v1330
    %v1424 = vunpack.c.h.b16 %v1330
    %v1425 = vunpack.c.l.b16 %v1331
    %v1426 = vunpack.c.h.b16 %v1331
    %v1427 = vunpack.c.l.b16 %v1332
    %v1428 = vunpack.c.h.b16 %v1332
    %v1429 = vpack.c.b16 %v1369, %v1365
    %v1430 = vpack.c.b16 %v1370, %v1366
    %v1431 = vpack.c.b16 %v1371, %v1367
    %v1432 = vpack.c.b16 %v1372, %v1368
    %v1433 = vpack.c.b16 %v1377, %v1373
    %v1434 = vpack.c.b16 %v1378, %v1374
    %v1435 = vpack.c.b16 %v1379, %v1375
    %v1436 = vpack.c.b16 %v1380, %v1376
    %v1437 = vpack.c.b16 %v1385, %v1381
    %v1438 = vpack.c.b16 %v1386, %v1382
    %v1439 = vpack.c.b16 %v1387, %v1383
    %v1440 = vpack.c.b16 %v1388, %v1384
    %v1441 = vpack.c.b16 %v1393, %v1389
    %v1442 = vpack.c.b16 %v1394, %v1390
    %v1443 = vpack.c.b16 %v1395, %v1391
    %v1444 = vpack.c.b16 %v1396, %v1392
    %v1445 = vpack.c.b16 %v1401, %v1397
    %v1446 = vpack.c.b16 %v1402, %v1398
    %v1447 = vpack.c.b16 %v1403, %v1399
    %v1448 = vpack.c.b16 %v1404, %v1400
    %v1449 = vpack.c.b16 %v1409, %v1405
    %v1450 = vpack.c.b16 %v1410, %v1406
    %v1451 = vpack.c.b16 %v1411, %v1407
    %v1452 = vpack.c.b16 %v1412, %v1408
    %v1453 = vpack.c.b16 %v1417, %v1413
    %v1454 = vpack.c.b16 %v1418, %v1414
    %v1455 = vpack.c.b16 %v1419, %v1415
    %v1456 = vpack.c.b16 %v1420, %v1416
    %v1457 = vpack.c.b16 %v1425, %v1421
    %v1458 = vpack.c.b16 %v1426, %v1422
    %v1459 = vpack.c.b16 %v1427, %v1423
    %v1460 = vpack.c.b16 %v1428, %v1424
    %1493 = vmatprep.subr.bf16.mxu0 %v1430
    %1494 = vmatpush1.bf16.msra.mxu0 %v1429
    %1495 = vmatprep.subr.bf16.mxu0 %v1434
    %1496 = vmatpush1.bf16.msra.mxu0 %v1433
    %1497 = vmatprep.subr.bf16.mxu0 %v1438
    %1498 = vmatpush1.bf16.msra.mxu0 %v1437
    %1499 = vmatprep.subr.bf16.mxu0 %v1442
    %1500 = vmatpush1.bf16.msra.mxu0 %v1441
    %1501 = vmatprep.subr.bf16.mxu0 %v1446
    %1502 = vmatpush1.bf16.msra.mxu0 %v1445
    %1503 = vmatprep.subr.bf16.mxu0 %v1450
    %1504 = vmatpush1.bf16.msra.mxu0 %v1449
    %1505 = vmatprep.subr.bf16.mxu0 %v1454
    %1506 = vmatpush1.bf16.msra.mxu0 %v1453
    %1507 = vmatprep.subr.bf16.mxu0 %v1458
    %1508 = vmatpush1.bf16.msra.mxu0 %v1457
    %1509 = vmatprep.subr.bf16.mxu0 0
    %1510 = vmatpush1.bf16.msra.mxu0 0
    %1511 = vmatprep.subr.bf16.mxu0 0
    %1512 = vmatpush1.bf16.msra.mxu0 0
    %1513 = vmatprep.subr.bf16.mxu0 0
    %1514 = vmatpush1.bf16.msra.mxu0 0
    %1515 = vmatprep.subr.bf16.mxu0 0
    %1516 = vmatpush1.bf16.msra.mxu0 0
    %1517 = vmatprep.subr.bf16.mxu0 0
    %1518 = vmatpush1.bf16.msra.mxu0 0
    %1519 = vmatprep.subr.bf16.mxu0 0
    %1520 = vmatpush1.bf16.msra.mxu0 0
    %1521 = vmatprep.subr.bf16.mxu0 0
    %1522 = vmatpush1.bf16.msra.mxu0 0
    %1523 = vmatprep.subr.bf16.mxu0 0
    %1524 = vmatpush1.bf16.msra.mxu0 0
    %1525 = vmatprep.mubr.bf16.mxu0 0
    %1526 = vmatmul.mubr.bf16.gmra.mrb[0].mxu0 %v1300
    %v1527 = vpop.f32.mrb[0].mxu0
    %v1528 = vadd.f32 0.0, %v1527
    %v1529 = vpop.f32.mrb[0].mxu0
    %v1530 = vadd.f32 0.0, %v1529
    %v1531 = vpop.f32.mrb[0].mxu0
    %v1532 = vpop.f32.mrb[0].mxu0
    %1533 = vdwg.mxu0
    %1534 = vmatprep.subr.bf16.mxu0 %v1432
    %1535 = vmatpush1.bf16.msra.mxu0 %v1431
    %1536 = vmatprep.subr.bf16.mxu0 %v1436
    %1537 = vmatpush1.bf16.msra.mxu0 %v1435
    %1538 = vmatprep.subr.bf16.mxu0 %v1440
    %1539 = vmatpush1.bf16.msra.mxu0 %v1439
    %1540 = vmatprep.subr.bf16.mxu0 %v1444
    %1541 = vmatpush1.bf16.msra.mxu0 %v1443
    %1542 = vmatprep.subr.bf16.mxu0 %v1448
    %1543 = vmatpush1.bf16.msra.mxu0 %v1447
    %1544 = vmatprep.subr.bf16.mxu0 %v1452
    %1545 = vmatpush1.bf16.msra.mxu0 %v1451
    %1546 = vmatprep.subr.bf16.mxu0 %v1456
    %1547 = vmatpush1.bf16.msra.mxu0 %v1455
    %1548 = vmatprep.subr.bf16.mxu0 %v1460
    %1549 = vmatpush1.bf16.msra.mxu0 %v1459
    %1550 = vmatprep.subr.bf16.mxu0 0
    %1551 = vmatpush1.bf16.msra.mxu0 0
    %1552 = vmatprep.subr.bf16.mxu0 0
    %1553 = vmatpush1.bf16.msra.mxu0 0
    %1554 = vmatprep.subr.bf16.mxu0 0
    %1555 = vmatpush1.bf16.msra.mxu0 0
    %1556 = vmatprep.subr.bf16.mxu0 0
    %1557 = vmatpush1.bf16.msra.mxu0 0
    %1558 = vmatprep.subr.bf16.mxu0 0
    %1559 = vmatpush1.bf16.msra.mxu0 0
    %1560 = vmatprep.subr.bf16.mxu0 0
    %1561 = vmatpush1.bf16.msra.mxu0 0
    %1562 = vmatprep.subr.bf16.mxu0 0
    %1563 = vmatpush1.bf16.msra.mxu0 0
    %1564 = vmatprep.subr.bf16.mxu0 0
    %1565 = vmatpush1.bf16.msra.mxu0 0
    %1566 = vmatprep.mubr.bf16.mxu0 0
    %1567 = vmatmul.mubr.bf16.gmra.mrb[0].mxu0 %v1300
    %v1568 = vpop.f32.mrb[0].mxu0
    %v1569 = vadd.f32 0.0, %v1568
    %v1570 = vpop.f32.mrb[0].mxu0
    %v1571 = vadd.f32 0.0, %v1570
    %v1572 = vpop.f32.mrb[0].mxu0
    %v1573 = vpop.f32.mrb[0].mxu0
    %1574 = vdwg.mxu0
    %s1575 = scalar_lea.vmem [#allocation4], 128
    %v1576 = vld [vmem:[%s1575] sm:$0xff]
    %v1577 = vld [vmem:[%s1575 + $0x8] sm:$0xff]
    %v1578 = vld [vmem:[%s1575 + $0x10] sm:$0xff]
    %v1579 = vld [vmem:[%s1575 + $0x18] sm:$0xff]
    %v1580 = vadd.f32 %v1576, %v1528
    %v1581 = vadd.f32 %v1577, %v1530
    %v1582 = vadd.f32 %v1578, %v1569
    %v1583 = vadd.f32 %v1579, %v1571
    %v1584 = vxor.u32 %v1580, 2147483648
    %v1585 = vmul.f32 %v1584, 1.442695
    %v1586 = vpow.pop %v1585
    %v1587 = vadd.f32 %v1586, 1.0
    %v1588 = vrcp.pop %v1587
    %v1589 = vmul.f32 1.0, %v1588
    %v1590 = vxor.u32 %v1581, 2147483648
    %v1591 = vmul.f32 %v1590, 1.442695
    %v1592 = vpow.pop %v1591
    %v1593 = vadd.f32 %v1592, 1.0
    %v1594 = vrcp.pop %v1593
    %v1595 = vmul.f32 1.0, %v1594
    %v1596 = vtanh.pop %v1582
    %v1597 = vxor.u32 %v1583, 2147483648
    %v1598 = vmul.f32 %v1597, 1.442695
    %v1599 = vpow.pop %v1598
    %v1600 = vadd.f32 %v1599, 1.0
    %v1601 = vrcp.pop %v1600
    %v1602 = vmul.f32 1.0, %v1601
    %v1603 = vld [vmem:[#allocation3] sm:$0xff]
    %v1604 = vmul.f32 %v1595, %v1603
    %v1605 = vmul.f32 %v1589, %v1596
    %v1606 = vadd.f32 %v1604, %v1605
    %v1607 = vtanh.pop %v1606
    %v1608 = vmul.f32 %v1602, %v1607
    %1609 = vst [vmem:[#allocation2] sm:$0xff] %v1608
    %1610 = vst [vmem:[#allocation3] sm:$0xff] %v1606
    %v1611 = vld [vmem:[#allocation2] sm:$0xff]
    %v1612 = vpack.c.bf16 %v1611, %v1611
    %v1613 = vld [vmem:[#allocation6] sm:$0xff]
    %v1614 = vld [vmem:[#allocation6 + $0x8] sm:$0xff]
    %v1615 = vld [vmem:[#allocation6 + $0x10] sm:$0xff]
    %v1616 = vld [vmem:[#allocation6 + $0x18] sm:$0xff]
    %v1617 = vld [vmem:[#allocation6 + $0x20] sm:$0xff]
    %v1618 = vld [vmem:[#allocation6 + $0x28] sm:$0xff]
    %v1619 = vld [vmem:[#allocation6 + $0x30] sm:$0xff]
    %v1620 = vld [vmem:[#allocation6 + $0x38] sm:$0xff]
    %v1621 = vld [vmem:[#allocation6 + $0x40] sm:$0xff]
    %v1622 = vld [vmem:[#allocation6 + $0x48] sm:$0xff]
    %v1623 = vld [vmem:[#allocation6 + $0x50] sm:$0xff]
    %v1624 = vld [vmem:[#allocation6 + $0x58] sm:$0xff]
    %v1625 = vld [vmem:[#allocation6 + $0x60] sm:$0xff]
    %v1626 = vld [vmem:[#allocation6 + $0x68] sm:$0xff]
    %v1627 = vld [vmem:[#allocation6 + $0x70] sm:$0xff]
    %v1628 = vld [vmem:[#allocation6 + $0x78] sm:$0xff]
    %v1629 = vld [vmem:[#allocation6 + $0x80] sm:$0xff]
    %v1630 = vld [vmem:[#allocation6 + $0x88] sm:$0xff]
    %v1631 = vld [vmem:[#allocation6 + $0x90] sm:$0xff]
    %v1632 = vld [vmem:[#allocation6 + $0x98] sm:$0xff]
    %v1633 = vld [vmem:[#allocation6 + $0xa0] sm:$0xff]
    %v1634 = vld [vmem:[#allocation6 + $0xa8] sm:$0xff]
    %v1635 = vld [vmem:[#allocation6 + $0xb0] sm:$0xff]
    %v1636 = vld [vmem:[#allocation6 + $0xb8] sm:$0xff]
    %v1637 = vld [vmem:[#allocation6 + $0xc0] sm:$0xff]
    %v1638 = vld [vmem:[#allocation6 + $0xc8] sm:$0xff]
    %v1639 = vld [vmem:[#allocation6 + $0xd0] sm:$0xff]
    %v1640 = vld [vmem:[#allocation6 + $0xd8] sm:$0xff]
    %v1641 = vld [vmem:[#allocation6 + $0xe0] sm:$0xff]
    %v1642 = vld [vmem:[#allocation6 + $0xe8] sm:$0xff]
    %v1643 = vld [vmem:[#allocation6 + $0xf0] sm:$0xff]
    %v1644 = vld [vmem:[#allocation6 + $0xf8] sm:$0xff]
    %v1677 = vunpack.c.l.b16 %v1613
    %v1678 = vunpack.c.h.b16 %v1613
    %v1679 = vunpack.c.l.b16 %v1614
    %v1680 = vunpack.c.h.b16 %v1614
    %v1681 = vunpack.c.l.b16 %v1615
    %v1682 = vunpack.c.h.b16 %v1615
    %v1683 = vunpack.c.l.b16 %v1616
    %v1684 = vunpack.c.h.b16 %v1616
    %v1685 = vunpack.c.l.b16 %v1617
    %v1686 = vunpack.c.h.b16 %v1617
    %v1687 = vunpack.c.l.b16 %v1618
    %v1688 = vunpack.c.h.b16 %v1618
    %v1689 = vunpack.c.l.b16 %v1619
    %v1690 = vunpack.c.h.b16 %v1619
    %v1691 = vunpack.c.l.b16 %v1620
    %v1692 = vunpack.c.h.b16 %v1620
    %v1693 = vunpack.c.l.b16 %v1621
    %v1694 = vunpack.c.h.b16 %v1621
    %v1695 = vunpack.c.l.b16 %v1622
    %v1696 = vunpack.c.h.b16 %v1622
    %v1697 = vunpack.c.l.b16 %v1623
    %v1698 = vunpack.c.h.b16 %v1623
    %v1699 = vunpack.c.l.b16 %v1624
    %v1700 = vunpack.c.h.b16 %v1624
    %v1701 = vunpack.c.l.b16 %v1625
    %v1702 = vunpack.c.h.b16 %v1625
    %v1703 = vunpack.c.l.b16 %v1626
    %v1704 = vunpack.c.h.b16 %v1626
    %v1705 = vunpack.c.l.b16 %v1627
    %v1706 = vunpack.c.h.b16 %v1627
    %v1707 = vunpack.c.l.b16 %v1628
    %v1708 = vunpack.c.h.b16 %v1628
    %v1709 = vunpack.c.l.b16 %v1629
    %v1710 = vunpack.c.h.b16 %v1629
    %v1711 = vunpack.c.l.b16 %v1630
    %v1712 = vunpack.c.h.b16 %v1630
    %v1713 = vunpack.c.l.b16 %v1631
    %v1714 = vunpack.c.h.b16 %v1631
    %v1715 = vunpack.c.l.b16 %v1632
    %v1716 = vunpack.c.h.b16 %v1632
    %v1717 = vunpack.c.l.b16 %v1633
    %v1718 = vunpack.c.h.b16 %v1633
    %v1719 = vunpack.c.l.b16 %v1634
    %v1720 = vunpack.c.h.b16 %v1634
    %v1721 = vunpack.c.l.b16 %v1635
    %v1722 = vunpack.c.h.b16 %v1635
    %v1723 = vunpack.c.l.b16 %v1636
    %v1724 = vunpack.c.h.b16 %v1636
    %v1725 = vunpack.c.l.b16 %v1637
    %v1726 = vunpack.c.h.b16 %v1637
    %v1727 = vunpack.c.l.b16 %v1638
    %v1728 = vunpack.c.h.b16 %v1638
    %v1729 = vunpack.c.l.b16 %v1639
    %v1730 = vunpack.c.h.b16 %v1639
    %v1731 = vunpack.c.l.b16 %v1640
    %v1732 = vunpack.c.h.b16 %v1640
    %v1733 = vunpack.c.l.b16 %v1641
    %v1734 = vunpack.c.h.b16 %v1641
    %v1735 = vunpack.c.l.b16 %v1642
    %v1736 = vunpack.c.h.b16 %v1642
    %v1737 = vunpack.c.l.b16 %v1643
    %v1738 = vunpack.c.h.b16 %v1643
    %v1739 = vunpack.c.l.b16 %v1644
    %v1740 = vunpack.c.h.b16 %v1644
    %v1741 = vpack.c.b16 %v1681, %v1677
    %v1742 = vpack.c.b16 %v1682, %v1678
    %v1743 = vpack.c.b16 %v1683, %v1679
    %v1744 = vpack.c.b16 %v1684, %v1680
    %v1745 = vpack.c.b16 %v1689, %v1685
    %v1746 = vpack.c.b16 %v1690, %v1686
    %v1747 = vpack.c.b16 %v1691, %v1687
    %v1748 = vpack.c.b16 %v1692, %v1688
    %v1749 = vpack.c.b16 %v1697, %v1693
    %v1750 = vpack.c.b16 %v1698, %v1694
    %v1751 = vpack.c.b16 %v1699, %v1695
    %v1752 = vpack.c.b16 %v1700, %v1696
    %v1753 = vpack.c.b16 %v1705, %v1701
    %v1754 = vpack.c.b16 %v1706, %v1702
    %v1755 = vpack.c.b16 %v1707, %v1703
    %v1756 = vpack.c.b16 %v1708, %v1704
    %v1757 = vpack.c.b16 %v1713, %v1709
    %v1758 = vpack.c.b16 %v1714, %v1710
    %v1759 = vpack.c.b16 %v1715, %v1711
    %v1760 = vpack.c.b16 %v1716, %v1712
    %v1761 = vpack.c.b16 %v1721, %v1717
    %v1762 = vpack.c.b16 %v1722, %v1718
    %v1763 = vpack.c.b16 %v1723, %v1719
    %v1764 = vpack.c.b16 %v1724, %v1720
    %v1765 = vpack.c.b16 %v1729, %v1725
    %v1766 = vpack.c.b16 %v1730, %v1726
    %v1767 = vpack.c.b16 %v1731, %v1727
    %v1768 = vpack.c.b16 %v1732, %v1728
    %v1769 = vpack.c.b16 %v1737, %v1733
    %v1770 = vpack.c.b16 %v1738, %v1734
    %v1771 = vpack.c.b16 %v1739, %v1735
    %v1772 = vpack.c.b16 %v1740, %v1736
    %1805 = vmatprep.subr.bf16.mxu0 %v1742
    %1806 = vmatpush1.bf16.msra.mxu0 %v1741
    %1807 = vmatprep.subr.bf16.mxu0 %v1746
    %1808 = vmatpush1.bf16.msra.mxu0 %v1745
    %1809 = vmatprep.subr.bf16.mxu0 %v1750
    %1810 = vmatpush1.bf16.msra.mxu0 %v1749
    %1811 = vmatprep.subr.bf16.mxu0 %v1754
    %1812 = vmatpush1.bf16.msra.mxu0 %v1753
    %1813 = vmatprep.subr.bf16.mxu0 %v1758
    %1814 = vmatpush1.bf16.msra.mxu0 %v1757
    %1815 = vmatprep.subr.bf16.mxu0 %v1762
    %1816 = vmatpush1.bf16.msra.mxu0 %v1761
    %1817 = vmatprep.subr.bf16.mxu0 %v1766
    %1818 = vmatpush1.bf16.msra.mxu0 %v1765
    %1819 = vmatprep.subr.bf16.mxu0 %v1770
    %1820 = vmatpush1.bf16.msra.mxu0 %v1769
    %1821 = vmatprep.subr.bf16.mxu0 0
    %1822 = vmatpush1.bf16.msra.mxu0 0
    %1823 = vmatprep.subr.bf16.mxu0 0
    %1824 = vmatpush1.bf16.msra.mxu0 0
    %1825 = vmatprep.subr.bf16.mxu0 0
    %1826 = vmatpush1.bf16.msra.mxu0 0
    %1827 = vmatprep.subr.bf16.mxu0 0
    %1828 = vmatpush1.bf16.msra.mxu0 0
    %1829 = vmatprep.subr.bf16.mxu0 0
    %1830 = vmatpush1.bf16.msra.mxu0 0
    %1831 = vmatprep.subr.bf16.mxu0 0
    %1832 = vmatpush1.bf16.msra.mxu0 0
    %1833 = vmatprep.subr.bf16.mxu0 0
    %1834 = vmatpush1.bf16.msra.mxu0 0
    %1835 = vmatprep.subr.bf16.mxu0 0
    %1836 = vmatpush1.bf16.msra.mxu0 0
    %1837 = vmatprep.mubr.bf16.mxu0 0
    %1838 = vmatmul.mubr.bf16.gmra.mrb[0].mxu0 %v1612
    %v1839 = vpop.f32.mrb[0].mxu0
    %v1840 = vadd.f32 0.0, %v1839
    %v1841 = vpop.f32.mrb[0].mxu0
    %v1842 = vadd.f32 0.0, %v1841
    %v1843 = vpop.f32.mrb[0].mxu0
    %v1844 = vpop.f32.mrb[0].mxu0
    %1845 = vdwg.mxu0
    %1846 = vmatprep.subr.bf16.mxu0 %v1744
    %1847 = vmatpush1.bf16.msra.mxu0 %v1743
    %1848 = vmatprep.subr.bf16.mxu0 %v1748
    %1849 = vmatpush1.bf16.msra.mxu0 %v1747
    %1850 = vmatprep.subr.bf16.mxu0 %v1752
    %1851 = vmatpush1.bf16.msra.mxu0 %v1751
    %1852 = vmatprep.subr.bf16.mxu0 %v1756
    %1853 = vmatpush1.bf16.msra.mxu0 %v1755
    %1854 = vmatprep.subr.bf16.mxu0 %v1760
    %1855 = vmatpush1.bf16.msra.mxu0 %v1759
    %1856 = vmatprep.subr.bf16.mxu0 %v1764
    %1857 = vmatpush1.bf16.msra.mxu0 %v1763
    %1858 = vmatprep.subr.bf16.mxu0 %v1768
    %1859 = vmatpush1.bf16.msra.mxu0 %v1767
    %1860 = vmatprep.subr.bf16.mxu0 %v1772
    %1861 = vmatpush1.bf16.msra.mxu0 %v1771
    %1862 = vmatprep.subr.bf16.mxu0 0
    %1863 = vmatpush1.bf16.msra.mxu0 0
    %1864 = vmatprep.subr.bf16.mxu0 0
    %1865 = vmatpush1.bf16.msra.mxu0 0
    %1866 = vmatprep.subr.bf16.mxu0 0
    %1867 = vmatpush1.bf16.msra.mxu0 0
    %1868 = vmatprep.subr.bf16.mxu0 0
    %1869 = vmatpush1.bf16.msra.mxu0 0
    %1870 = vmatprep.subr.bf16.mxu0 0
    %1871 = vmatpush1.bf16.msra.mxu0 0
    %1872 = vmatprep.subr.bf16.mxu0 0
    %1873 = vmatpush1.bf16.msra.mxu0 0
    %1874 = vmatprep.subr.bf16.mxu0 0
    %1875 = vmatpush1.bf16.msra.mxu0 0
    %1876 = vmatprep.subr.bf16.mxu0 0
    %1877 = vmatpush1.bf16.msra.mxu0 0
    %1878 = vmatprep.mubr.bf16.mxu0 0
    %1879 = vmatmul.mubr.bf16.gmra.mrb[0].mxu0 %v1612
    %v1880 = vpop.f32.mrb[0].mxu0
    %v1881 = vadd.f32 0.0, %v1880
    %v1882 = vpop.f32.mrb[0].mxu0
    %v1883 = vadd.f32 0.0, %v1882
    %v1884 = vpop.f32.mrb[0].mxu0
    %v1885 = vpop.f32.mrb[0].mxu0
    %1886 = vdwg.mxu0
    %s1887 = scalar_lea.vmem [#allocation4], 160
    %v1888 = vld [vmem:[%s1887] sm:$0xff]
    %v1889 = vld [vmem:[%s1887 + $0x8] sm:$0xff]
    %v1890 = vld [vmem:[%s1887 + $0x10] sm:$0xff]
    %v1891 = vld [vmem:[%s1887 + $0x18] sm:$0xff]
    %v1892 = vadd.f32 %v1888, %v1840
    %v1893 = vadd.f32 %v1889, %v1842
    %v1894 = vadd.f32 %v1890, %v1881
    %v1895 = vadd.f32 %v1891, %v1883
    %v1896 = vxor.u32 %v1892, 2147483648
    %v1897 = vmul.f32 %v1896, 1.442695
    %v1898 = vpow.pop %v1897
    %v1899 = vadd.f32 %v1898, 1.0
    %v1900 = vrcp.pop %v1899
    %v1901 = vmul.f32 1.0, %v1900
    %v1902 = vxor.u32 %v1893, 2147483648
    %v1903 = vmul.f32 %v1902, 1.442695
    %v1904 = vpow.pop %v1903
    %v1905 = vadd.f32 %v1904, 1.0
    %v1906 = vrcp.pop %v1905
    %v1907 = vmul.f32 1.0, %v1906
    %v1908 = vtanh.pop %v1894
    %v1909 = vxor.u32 %v1895, 2147483648
    %v1910 = vmul.f32 %v1909, 1.442695
    %v1911 = vpow.pop %v1910
    %v1912 = vadd.f32 %v1911, 1.0
    %v1913 = vrcp.pop %v1912
    %v1914 = vmul.f32 1.0, %v1913
    %v1915 = vld [vmem:[#allocation3] sm:$0xff]
    %v1916 = vmul.f32 %v1907, %v1915
    %v1917 = vmul.f32 %v1901, %v1908
    %v1918 = vadd.f32 %v1916, %v1917
    %v1919 = vtanh.pop %v1918
    %v1920 = vmul.f32 %v1914, %v1919
    %1921 = vst [vmem:[#allocation2] sm:$0xff] %v1920
    %1922 = vst [vmem:[#allocation3] sm:$0xff] %v1918
    %v1923 = vld [vmem:[#allocation2] sm:$0xff]
    %v1924 = vpack.c.bf16 %v1923, %v1923
    %v1925 = vld [vmem:[#allocation6] sm:$0xff]
    %v1926 = vld [vmem:[#allocation6 + $0x8] sm:$0xff]
    %v1927 = vld [vmem:[#allocation6 + $0x10] sm:$0xff]
    %v1928 = vld [vmem:[#allocation6 + $0x18] sm:$0xff]
    %v1929 = vld [vmem:[#allocation6 + $0x20] sm:$0xff]
    %v1930 = vld [vmem:[#allocation6 + $0x28] sm:$0xff]
    %v1931 = vld [vmem:[#allocation6 + $0x30] sm:$0xff]
    %v1932 = vld [vmem:[#allocation6 + $0x38] sm:$0xff]
    %v1933 = vld [vmem:[#allocation6 + $0x40] sm:$0xff]
    %v1934 = vld [vmem:[#allocation6 + $0x48] sm:$0xff]
    %v1935 = vld [vmem:[#allocation6 + $0x50] sm:$0xff]
    %v1936 = vld [vmem:[#allocation6 + $0x58] sm:$0xff]
    %v1937 = vld [vmem:[#allocation6 + $0x60] sm:$0xff]
    %v1938 = vld [vmem:[#allocation6 + $0x68] sm:$0xff]
    %v1939 = vld [vmem:[#allocation6 + $0x70] sm:$0xff]
    %v1940 = vld [vmem:[#allocation6 + $0x78] sm:$0xff]
    %v1941 = vld [vmem:[#allocation6 + $0x80] sm:$0xff]
    %v1942 = vld [vmem:[#allocation6 + $0x88] sm:$0xff]
    %v1943 = vld [vmem:[#allocation6 + $0x90] sm:$0xff]
    %v1944 = vld [vmem:[#allocation6 + $0x98] sm:$0xff]
    %v1945 = vld [vmem:[#allocation6 + $0xa0] sm:$0xff]
    %v1946 = vld [vmem:[#allocation6 + $0xa8] sm:$0xff]
    %v1947 = vld [vmem:[#allocation6 + $0xb0] sm:$0xff]
    %v1948 = vld [vmem:[#allocation6 + $0xb8] sm:$0xff]
    %v1949 = vld [vmem:[#allocation6 + $0xc0] sm:$0xff]
    %v1950 = vld [vmem:[#allocation6 + $0xc8] sm:$0xff]
    %v1951 = vld [vmem:[#allocation6 + $0xd0] sm:$0xff]
    %v1952 = vld [vmem:[#allocation6 + $0xd8] sm:$0xff]
    %v1953 = vld [vmem:[#allocation6 + $0xe0] sm:$0xff]
    %v1954 = vld [vmem:[#allocation6 + $0xe8] sm:$0xff]
    %v1955 = vld [vmem:[#allocation6 + $0xf0] sm:$0xff]
    %v1956 = vld [vmem:[#allocation6 + $0xf8] sm:$0xff]
    %v1989 = vunpack.c.l.b16 %v1925
    %v1990 = vunpack.c.h.b16 %v1925
    %v1991 = vunpack.c.l.b16 %v1926
    %v1992 = vunpack.c.h.b16 %v1926
    %v1993 = vunpack.c.l.b16 %v1927
    %v1994 = vunpack.c.h.b16 %v1927
    %v1995 = vunpack.c.l.b16 %v1928
    %v1996 = vunpack.c.h.b16 %v1928
    %v1997 = vunpack.c.l.b16 %v1929
    %v1998 = vunpack.c.h.b16 %v1929
    %v1999 = vunpack.c.l.b16 %v1930
    %v2000 = vunpack.c.h.b16 %v1930
    %v2001 = vunpack.c.l.b16 %v1931
    %v2002 = vunpack.c.h.b16 %v1931
    %v2003 = vunpack.c.l.b16 %v1932
    %v2004 = vunpack.c.h.b16 %v1932
    %v2005 = vunpack.c.l.b16 %v1933
    %v2006 = vunpack.c.h.b16 %v1933
    %v2007 = vunpack.c.l.b16 %v1934
    %v2008 = vunpack.c.h.b16 %v1934
    %v2009 = vunpack.c.l.b16 %v1935
    %v2010 = vunpack.c.h.b16 %v1935
    %v2011 = vunpack.c.l.b16 %v1936
    %v2012 = vunpack.c.h.b16 %v1936
    %v2013 = vunpack.c.l.b16 %v1937
    %v2014 = vunpack.c.h.b16 %v1937
    %v2015 = vunpack.c.l.b16 %v1938
    %v2016 = vunpack.c.h.b16 %v1938
    %v2017 = vunpack.c.l.b16 %v1939
    %v2018 = vunpack.c.h.b16 %v1939
    %v2019 = vunpack.c.l.b16 %v1940
    %v2020 = vunpack.c.h.b16 %v1940
    %v2021 = vunpack.c.l.b16 %v1941
    %v2022 = vunpack.c.h.b16 %v1941
    %v2023 = vunpack.c.l.b16 %v1942
    %v2024 = vunpack.c.h.b16 %v1942
    %v2025 = vunpack.c.l.b16 %v1943
    %v2026 = vunpack.c.h.b16 %v1943
    %v2027 = vunpack.c.l.b16 %v1944
    %v2028 = vunpack.c.h.b16 %v1944
    %v2029 = vunpack.c.l.b16 %v1945
    %v2030 = vunpack.c.h.b16 %v1945
    %v2031 = vunpack.c.l.b16 %v1946
    %v2032 = vunpack.c.h.b16 %v1946
    %v2033 = vunpack.c.l.b16 %v1947
    %v2034 = vunpack.c.h.b16 %v1947
    %v2035 = vunpack.c.l.b16 %v1948
    %v2036 = vunpack.c.h.b16 %v1948
    %v2037 = vunpack.c.l.b16 %v1949
    %v2038 = vunpack.c.h.b16 %v1949
    %v2039 = vunpack.c.l.b16 %v1950
    %v2040 = vunpack.c.h.b16 %v1950
    %v2041 = vunpack.c.l.b16 %v1951
    %v2042 = vunpack.c.h.b16 %v1951
    %v2043 = vunpack.c.l.b16 %v1952
    %v2044 = vunpack.c.h.b16 %v1952
    %v2045 = vunpack.c.l.b16 %v1953
    %v2046 = vunpack.c.h.b16 %v1953
    %v2047 = vunpack.c.l.b16 %v1954
    %v2048 = vunpack.c.h.b16 %v1954
    %v2049 = vunpack.c.l.b16 %v1955
    %v2050 = vunpack.c.h.b16 %v1955
    %v2051 = vunpack.c.l.b16 %v1956
    %v2052 = vunpack.c.h.b16 %v1956
    %v2053 = vpack.c.b16 %v1993, %v1989
    %v2054 = vpack.c.b16 %v1994, %v1990
    %v2055 = vpack.c.b16 %v1995, %v1991
    %v2056 = vpack.c.b16 %v1996, %v1992
    %v2057 = vpack.c.b16 %v2001, %v1997
    %v2058 = vpack.c.b16 %v2002, %v1998
    %v2059 = vpack.c.b16 %v2003, %v1999
    %v2060 = vpack.c.b16 %v2004, %v2000
    %v2061 = vpack.c.b16 %v2009, %v2005
    %v2062 = vpack.c.b16 %v2010, %v2006
    %v2063 = vpack.c.b16 %v2011, %v2007
    %v2064 = vpack.c.b16 %v2012, %v2008
    %v2065 = vpack.c.b16 %v2017, %v2013
    %v2066 = vpack.c.b16 %v2018, %v2014
    %v2067 = vpack.c.b16 %v2019, %v2015
    %v2068 = vpack.c.b16 %v2020, %v2016
    %v2069 = vpack.c.b16 %v2025, %v2021
    %v2070 = vpack.c.b16 %v2026, %v2022
    %v2071 = vpack.c.b16 %v2027, %v2023
    %v2072 = vpack.c.b16 %v2028, %v2024
    %v2073 = vpack.c.b16 %v2033, %v2029
    %v2074 = vpack.c.b16 %v2034, %v2030
    %v2075 = vpack.c.b16 %v2035, %v2031
    %v2076 = vpack.c.b16 %v2036, %v2032
    %v2077 = vpack.c.b16 %v2041, %v2037
    %v2078 = vpack.c.b16 %v2042, %v2038
    %v2079 = vpack.c.b16 %v2043, %v2039
    %v2080 = vpack.c.b16 %v2044, %v2040
    %v2081 = vpack.c.b16 %v2049, %v2045
    %v2082 = vpack.c.b16 %v2050, %v2046
    %v2083 = vpack.c.b16 %v2051, %v2047
    %v2084 = vpack.c.b16 %v2052, %v2048
    %2117 = vmatprep.subr.bf16.mxu0 %v2054
    %2118 = vmatpush1.bf16.msra.mxu0 %v2053
    %2119 = vmatprep.subr.bf16.mxu0 %v2058
    %2120 = vmatpush1.bf16.msra.mxu0 %v2057
    %2121 = vmatprep.subr.bf16.mxu0 %v2062
    %2122 = vmatpush1.bf16.msra.mxu0 %v2061
    %2123 = vmatprep.subr.bf16.mxu0 %v2066
    %2124 = vmatpush1.bf16.msra.mxu0 %v2065
    %2125 = vmatprep.subr.bf16.mxu0 %v2070
    %2126 = vmatpush1.bf16.msra.mxu0 %v2069
    %2127 = vmatprep.subr.bf16.mxu0 %v2074
    %2128 = vmatpush1.bf16.msra.mxu0 %v2073
    %2129 = vmatprep.subr.bf16.mxu0 %v2078
    %2130 = vmatpush1.bf16.msra.mxu0 %v2077
    %2131 = vmatprep.subr.bf16.mxu0 %v2082
    %2132 = vmatpush1.bf16.msra.mxu0 %v2081
    %2133 = vmatprep.subr.bf16.mxu0 0
    %2134 = vmatpush1.bf16.msra.mxu0 0
    %2135 = vmatprep.subr.bf16.mxu0 0
    %2136 = vmatpush1.bf16.msra.mxu0 0
    %2137 = vmatprep.subr.bf16.mxu0 0
    %2138 = vmatpush1.bf16.msra.mxu0 0
    %2139 = vmatprep.subr.bf16.mxu0 0
    %2140 = vmatpush1.bf16.msra.mxu0 0
    %2141 = vmatprep.subr.bf16.mxu0 0
    %2142 = vmatpush1.bf16.msra.mxu0 0
    %2143 = vmatprep.subr.bf16.mxu0 0
    %2144 = vmatpush1.bf16.msra.mxu0 0
    %2145 = vmatprep.subr.bf16.mxu0 0
    %2146 = vmatpush1.bf16.msra.mxu0 0
    %2147 = vmatprep.subr.bf16.mxu0 0
    %2148 = vmatpush1.bf16.msra.mxu0 0
    %2149 = vmatprep.mubr.bf16.mxu0 0
    %2150 = vmatmul.mubr.bf16.gmra.mrb[0].mxu0 %v1924
    %v2151 = vpop.f32.mrb[0].mxu0
    %v2152 = vadd.f32 0.0, %v2151
    %v2153 = vpop.f32.mrb[0].mxu0
    %v2154 = vadd.f32 0.0, %v2153
    %v2155 = vpop.f32.mrb[0].mxu0
    %v2156 = vpop.f32.mrb[0].mxu0
    %2157 = vdwg.mxu0
    %2158 = vmatprep.subr.bf16.mxu0 %v2056
    %2159 = vmatpush1.bf16.msra.mxu0 %v2055
    %2160 = vmatprep.subr.bf16.mxu0 %v2060
    %2161 = vmatpush1.bf16.msra.mxu0 %v2059
    %2162 = vmatprep.subr.bf16.mxu0 %v2064
    %2163 = vmatpush1.bf16.msra.mxu0 %v2063
    %2164 = vmatprep.subr.bf16.mxu0 %v2068
    %2165 = vmatpush1.bf16.msra.mxu0 %v2067
    %2166 = vmatprep.subr.bf16.mxu0 %v2072
    %2167 = vmatpush1.bf16.msra.mxu0 %v2071
    %2168 = vmatprep.subr.bf16.mxu0 %v2076
    %2169 = vmatpush1.bf16.msra.mxu0 %v2075
    %2170 = vmatprep.subr.bf16.mxu0 %v2080
    %2171 = vmatpush1.bf16.msra.mxu0 %v2079
    %2172 = vmatprep.subr.bf16.mxu0 %v2084
    %2173 = vmatpush1.bf16.msra.mxu0 %v2083
    %2174 = vmatprep.subr.bf16.mxu0 0
    %2175 = vmatpush1.bf16.msra.mxu0 0
    %2176 = vmatprep.subr.bf16.mxu0 0
    %2177 = vmatpush1.bf16.msra.mxu0 0
    %2178 = vmatprep.subr.bf16.mxu0 0
    %2179 = vmatpush1.bf16.msra.mxu0 0
    %2180 = vmatprep.subr.bf16.mxu0 0
    %2181 = vmatpush1.bf16.msra.mxu0 0
    %2182 = vmatprep.subr.bf16.mxu0 0
    %2183 = vmatpush1.bf16.msra.mxu0 0
    %2184 = vmatprep.subr.bf16.mxu0 0
    %2185 = vmatpush1.bf16.msra.mxu0 0
    %2186 = vmatprep.subr.bf16.mxu0 0
    %2187 = vmatpush1.bf16.msra.mxu0 0
    %2188 = vmatprep.subr.bf16.mxu0 0
    %2189 = vmatpush1.bf16.msra.mxu0 0
    %2190 = vmatprep.mubr.bf16.mxu0 0
    %2191 = vmatmul.mubr.bf16.gmra.mrb[0].mxu0 %v1924
    %v2192 = vpop.f32.mrb[0].mxu0
    %v2193 = vadd.f32 0.0, %v2192
    %v2194 = vpop.f32.mrb[0].mxu0
    %v2195 = vadd.f32 0.0, %v2194
    %v2196 = vpop.f32.mrb[0].mxu0
    %v2197 = vpop.f32.mrb[0].mxu0
    %2198 = vdwg.mxu0
    %s2199 = scalar_lea.vmem [#allocation4], 192
    %v2200 = vld [vmem:[%s2199] sm:$0xff]
    %v2201 = vld [vmem:[%s2199 + $0x8] sm:$0xff]
    %v2202 = vld [vmem:[%s2199 + $0x10] sm:$0xff]
    %v2203 = vld [vmem:[%s2199 + $0x18] sm:$0xff]
    %v2204 = vadd.f32 %v2200, %v2152
    %v2205 = vadd.f32 %v2201, %v2154
    %v2206 = vadd.f32 %v2202, %v2193
    %v2207 = vadd.f32 %v2203, %v2195
    %v2208 = vxor.u32 %v2204, 2147483648
    %v2209 = vmul.f32 %v2208, 1.442695
    %v2210 = vpow.pop %v2209
    %v2211 = vadd.f32 %v2210, 1.0
    %v2212 = vrcp.pop %v2211
    %v2213 = vmul.f32 1.0, %v2212
    %v2214 = vxor.u32 %v2205, 2147483648
    %v2215 = vmul.f32 %v2214, 1.442695
    %v2216 = vpow.pop %v2215
    %v2217 = vadd.f32 %v2216, 1.0
    %v2218 = vrcp.pop %v2217
    %v2219 = vmul.f32 1.0, %v2218
    %v2220 = vtanh.pop %v2206
    %v2221 = vxor.u32 %v2207, 2147483648
    %v2222 = vmul.f32 %v2221, 1.442695
    %v2223 = vpow.pop %v2222
    %v2224 = vadd.f32 %v2223, 1.0
    %v2225 = vrcp.pop %v2224
    %v2226 = vmul.f32 1.0, %v2225
    %v2227 = vld [vmem:[#allocation3] sm:$0xff]
    %v2228 = vmul.f32 %v2219, %v2227
    %v2229 = vmul.f32 %v2213, %v2220
    %v2230 = vadd.f32 %v2228, %v2229
    %v2231 = vtanh.pop %v2230
    %v2232 = vmul.f32 %v2226, %v2231
    %2233 = vst [vmem:[#allocation2] sm:$0xff] %v2232
    %2234 = vst [vmem:[#allocation3] sm:$0xff] %v2230
    %v2235 = vld [vmem:[#allocation2] sm:$0xff]
    %v2236 = vpack.c.bf16 %v2235, %v2235
    %v2237 = vld [vmem:[#allocation6] sm:$0xff]
    %v2238 = vld [vmem:[#allocation6 + $0x8] sm:$0xff]
    %v2239 = vld [vmem:[#allocation6 + $0x10] sm:$0xff]
    %v2240 = vld [vmem:[#allocation6 + $0x18] sm:$0xff]
    %v2241 = vld [vmem:[#allocation6 + $0x20] sm:$0xff]
    %v2242 = vld [vmem:[#allocation6 + $0x28] sm:$0xff]
    %v2243 = vld [vmem:[#allocation6 + $0x30] sm:$0xff]
    %v2244 = vld [vmem:[#allocation6 + $0x38] sm:$0xff]
    %v2245 = vld [vmem:[#allocation6 + $0x40] sm:$0xff]
    %v2246 = vld [vmem:[#allocation6 + $0x48] sm:$0xff]
    %v2247 = vld [vmem:[#allocation6 + $0x50] sm:$0xff]
    %v2248 = vld [vmem:[#allocation6 + $0x58] sm:$0xff]
    %v2249 = vld [vmem:[#allocation6 + $0x60] sm:$0xff]
    %v2250 = vld [vmem:[#allocation6 + $0x68] sm:$0xff]
    %v2251 = vld [vmem:[#allocation6 + $0x70] sm:$0xff]
    %v2252 = vld [vmem:[#allocation6 + $0x78] sm:$0xff]
    %v2253 = vld [vmem:[#allocation6 + $0x80] sm:$0xff]
    %v2254 = vld [vmem:[#allocation6 + $0x88] sm:$0xff]
    %v2255 = vld [vmem:[#allocation6 + $0x90] sm:$0xff]
    %v2256 = vld [vmem:[#allocation6 + $0x98] sm:$0xff]
    %v2257 = vld [vmem:[#allocation6 + $0xa0] sm:$0xff]
    %v2258 = vld [vmem:[#allocation6 + $0xa8] sm:$0xff]
    %v2259 = vld [vmem:[#allocation6 + $0xb0] sm:$0xff]
    %v2260 = vld [vmem:[#allocation6 + $0xb8] sm:$0xff]
    %v2261 = vld [vmem:[#allocation6 + $0xc0] sm:$0xff]
    %v2262 = vld [vmem:[#allocation6 + $0xc8] sm:$0xff]
    %v2263 = vld [vmem:[#allocation6 + $0xd0] sm:$0xff]
    %v2264 = vld [vmem:[#allocation6 + $0xd8] sm:$0xff]
    %v2265 = vld [vmem:[#allocation6 + $0xe0] sm:$0xff]
    %v2266 = vld [vmem:[#allocation6 + $0xe8] sm:$0xff]
    %v2267 = vld [vmem:[#allocation6 + $0xf0] sm:$0xff]
    %v2268 = vld [vmem:[#allocation6 + $0xf8] sm:$0xff]
    %v2301 = vunpack.c.l.b16 %v2237
    %v2302 = vunpack.c.h.b16 %v2237
    %v2303 = vunpack.c.l.b16 %v2238
    %v2304 = vunpack.c.h.b16 %v2238
    %v2305 = vunpack.c.l.b16 %v2239
    %v2306 = vunpack.c.h.b16 %v2239
    %v2307 = vunpack.c.l.b16 %v2240
    %v2308 = vunpack.c.h.b16 %v2240
    %v2309 = vunpack.c.l.b16 %v2241
    %v2310 = vunpack.c.h.b16 %v2241
    %v2311 = vunpack.c.l.b16 %v2242
    %v2312 = vunpack.c.h.b16 %v2242
    %v2313 = vunpack.c.l.b16 %v2243
    %v2314 = vunpack.c.h.b16 %v2243
    %v2315 = vunpack.c.l.b16 %v2244
    %v2316 = vunpack.c.h.b16 %v2244
    %v2317 = vunpack.c.l.b16 %v2245
    %v2318 = vunpack.c.h.b16 %v2245
    %v2319 = vunpack.c.l.b16 %v2246
    %v2320 = vunpack.c.h.b16 %v2246
    %v2321 = vunpack.c.l.b16 %v2247
    %v2322 = vunpack.c.h.b16 %v2247
    %v2323 = vunpack.c.l.b16 %v2248
    %v2324 = vunpack.c.h.b16 %v2248
    %v2325 = vunpack.c.l.b16 %v2249
    %v2326 = vunpack.c.h.b16 %v2249
    %v2327 = vunpack.c.l.b16 %v2250
    %v2328 = vunpack.c.h.b16 %v2250
    %v2329 = vunpack.c.l.b16 %v2251
    %v2330 = vunpack.c.h.b16 %v2251
    %v2331 = vunpack.c.l.b16 %v2252
    %v2332 = vunpack.c.h.b16 %v2252
    %v2333 = vunpack.c.l.b16 %v2253
    %v2334 = vunpack.c.h.b16 %v2253
    %v2335 = vunpack.c.l.b16 %v2254
    %v2336 = vunpack.c.h.b16 %v2254
    %v2337 = vunpack.c.l.b16 %v2255
    %v2338 = vunpack.c.h.b16 %v2255
    %v2339 = vunpack.c.l.b16 %v2256
    %v2340 = vunpack.c.h.b16 %v2256
    %v2341 = vunpack.c.l.b16 %v2257
    %v2342 = vunpack.c.h.b16 %v2257
    %v2343 = vunpack.c.l.b16 %v2258
    %v2344 = vunpack.c.h.b16 %v2258
    %v2345 = vunpack.c.l.b16 %v2259
    %v2346 = vunpack.c.h.b16 %v2259
    %v2347 = vunpack.c.l.b16 %v2260
    %v2348 = vunpack.c.h.b16 %v2260
    %v2349 = vunpack.c.l.b16 %v2261
    %v2350 = vunpack.c.h.b16 %v2261
    %v2351 = vunpack.c.l.b16 %v2262
    %v2352 = vunpack.c.h.b16 %v2262
    %v2353 = vunpack.c.l.b16 %v2263
    %v2354 = vunpack.c.h.b16 %v2263
    %v2355 = vunpack.c.l.b16 %v2264
    %v2356 = vunpack.c.h.b16 %v2264
    %v2357 = vunpack.c.l.b16 %v2265
    %v2358 = vunpack.c.h.b16 %v2265
    %v2359 = vunpack.c.l.b16 %v2266
    %v2360 = vunpack.c.h.b16 %v2266
    %v2361 = vunpack.c.l.b16 %v2267
    %v2362 = vunpack.c.h.b16 %v2267
    %v2363 = vunpack.c.l.b16 %v2268
    %v2364 = vunpack.c.h.b16 %v2268
    %v2365 = vpack.c.b16 %v2305, %v2301
    %v2366 = vpack.c.b16 %v2306, %v2302
    %v2367 = vpack.c.b16 %v2307, %v2303
    %v2368 = vpack.c.b16 %v2308, %v2304
    %v2369 = vpack.c.b16 %v2313, %v2309
    %v2370 = vpack.c.b16 %v2314, %v2310
    %v2371 = vpack.c.b16 %v2315, %v2311
    %v2372 = vpack.c.b16 %v2316, %v2312
    %v2373 = vpack.c.b16 %v2321, %v2317
    %v2374 = vpack.c.b16 %v2322, %v2318
    %v2375 = vpack.c.b16 %v2323, %v2319
    %v2376 = vpack.c.b16 %v2324, %v2320
    %v2377 = vpack.c.b16 %v2329, %v2325
    %v2378 = vpack.c.b16 %v2330, %v2326
    %v2379 = vpack.c.b16 %v2331, %v2327
    %v2380 = vpack.c.b16 %v2332, %v2328
    %v2381 = vpack.c.b16 %v2337, %v2333
    %v2382 = vpack.c.b16 %v2338, %v2334
    %v2383 = vpack.c.b16 %v2339, %v2335
    %v2384 = vpack.c.b16 %v2340, %v2336
    %v2385 = vpack.c.b16 %v2345, %v2341
    %v2386 = vpack.c.b16 %v2346, %v2342
    %v2387 = vpack.c.b16 %v2347, %v2343
    %v2388 = vpack.c.b16 %v2348, %v2344
    %v2389 = vpack.c.b16 %v2353, %v2349
    %v2390 = vpack.c.b16 %v2354, %v2350
    %v2391 = vpack.c.b16 %v2355, %v2351
    %v2392 = vpack.c.b16 %v2356, %v2352
    %v2393 = vpack.c.b16 %v2361, %v2357
    %v2394 = vpack.c.b16 %v2362, %v2358
    %v2395 = vpack.c.b16 %v2363, %v2359
    %v2396 = vpack.c.b16 %v2364, %v2360
    %2429 = vmatprep.subr.bf16.mxu0 %v2366
    %2430 = vmatpush1.bf16.msra.mxu0 %v2365
    %2431 = vmatprep.subr.bf16.mxu0 %v2370
    %2432 = vmatpush1.bf16.msra.mxu0 %v2369
    %2433 = vmatprep.subr.bf16.mxu0 %v2374
    %2434 = vmatpush1.bf16.msra.mxu0 %v2373
    %2435 = vmatprep.subr.bf16.mxu0 %v2378
    %2436 = vmatpush1.bf16.msra.mxu0 %v2377
    %2437 = vmatprep.subr.bf16.mxu0 %v2382
    %2438 = vmatpush1.bf16.msra.mxu0 %v2381
    %2439 = vmatprep.subr.bf16.mxu0 %v2386
    %2440 = vmatpush1.bf16.msra.mxu0 %v2385
    %2441 = vmatprep.subr.bf16.mxu0 %v2390
    %2442 = vmatpush1.bf16.msra.mxu0 %v2389
    %2443 = vmatprep.subr.bf16.mxu0 %v2394
    %2444 = vmatpush1.bf16.msra.mxu0 %v2393
    %2445 = vmatprep.subr.bf16.mxu0 0
    %2446 = vmatpush1.bf16.msra.mxu0 0
    %2447 = vmatprep.subr.bf16.mxu0 0
    %2448 = vmatpush1.bf16.msra.mxu0 0
    %2449 = vmatprep.subr.bf16.mxu0 0
    %2450 = vmatpush1.bf16.msra.mxu0 0
    %2451 = vmatprep.subr.bf16.mxu0 0
    %2452 = vmatpush1.bf16.msra.mxu0 0
    %2453 = vmatprep.subr.bf16.mxu0 0
    %2454 = vmatpush1.bf16.msra.mxu0 0
    %2455 = vmatprep.subr.bf16.mxu0 0
    %2456 = vmatpush1.bf16.msra.mxu0 0
    %2457 = vmatprep.subr.bf16.mxu0 0
    %2458 = vmatpush1.bf16.msra.mxu0 0
    %2459 = vmatprep.subr.bf16.mxu0 0
    %2460 = vmatpush1.bf16.msra.mxu0 0
    %2461 = vmatprep.mubr.bf16.mxu0 0
    %2462 = vmatmul.mubr.bf16.gmra.mrb[0].mxu0 %v2236
    %v2463 = vpop.f32.mrb[0].mxu0
    %v2464 = vadd.f32 0.0, %v2463
    %v2465 = vpop.f32.mrb[0].mxu0
    %v2466 = vadd.f32 0.0, %v2465
    %v2467 = vpop.f32.mrb[0].mxu0
    %v2468 = vpop.f32.mrb[0].mxu0
    %2469 = vdwg.mxu0
    %2470 = vmatprep.subr.bf16.mxu0 %v2368
    %2471 = vmatpush1.bf16.msra.mxu0 %v2367
    %2472 = vmatprep.subr.bf16.mxu0 %v2372
    %2473 = vmatpush1.bf16.msra.mxu0 %v2371
    %2474 = vmatprep.subr.bf16.mxu0 %v2376
    %2475 = vmatpush1.bf16.msra.mxu0 %v2375
    %2476 = vmatprep.subr.bf16.mxu0 %v2380
    %2477 = vmatpush1.bf16.msra.mxu0 %v2379
    %2478 = vmatprep.subr.bf16.mxu0 %v2384
    %2479 = vmatpush1.bf16.msra.mxu0 %v2383
    %2480 = vmatprep.subr.bf16.mxu0 %v2388
    %2481 = vmatpush1.bf16.msra.mxu0 %v2387
    %2482 = vmatprep.subr.bf16.mxu0 %v2392
    %2483 = vmatpush1.bf16.msra.mxu0 %v2391
    %2484 = vmatprep.subr.bf16.mxu0 %v2396
    %2485 = vmatpush1.bf16.msra.mxu0 %v2395
    %2486 = vmatprep.subr.bf16.mxu0 0
    %2487 = vmatpush1.bf16.msra.mxu0 0
    %2488 = vmatprep.subr.bf16.mxu0 0
    %2489 = vmatpush1.bf16.msra.mxu0 0
    %2490 = vmatprep.subr.bf16.mxu0 0
    %2491 = vmatpush1.bf16.msra.mxu0 0
    %2492 = vmatprep.subr.bf16.mxu0 0
    %2493 = vmatpush1.bf16.msra.mxu0 0
    %2494 = vmatprep.subr.bf16.mxu0 0
    %2495 = vmatpush1.bf16.msra.mxu0 0
    %2496 = vmatprep.subr.bf16.mxu0 0
    %2497 = vmatpush1.bf16.msra.mxu0 0
    %2498 = vmatprep.subr.bf16.mxu0 0
    %2499 = vmatpush1.bf16.msra.mxu0 0
    %2500 = vmatprep.subr.bf16.mxu0 0
    %2501 = vmatpush1.bf16.msra.mxu0 0
    %2502 = vmatprep.mubr.bf16.mxu0 0
    %2503 = vmatmul.mubr.bf16.gmra.mrb[0].mxu0 %v2236
    %v2504 = vpop.f32.mrb[0].mxu0
    %v2505 = vadd.f32 0.0, %v2504
    %v2506 = vpop.f32.mrb[0].mxu0
    %v2507 = vadd.f32 0.0, %v2506
    %v2508 = vpop.f32.mrb[0].mxu0
    %v2509 = vpop.f32.mrb[0].mxu0
    %2510 = vdwg.mxu0
    %s2511 = scalar_lea.vmem [#allocation4], 224
    %v2512 = vld [vmem:[%s2511] sm:$0xff]
    %v2513 = vld [vmem:[%s2511 + $0x8] sm:$0xff]
    %v2514 = vld [vmem:[%s2511 + $0x10] sm:$0xff]
    %v2515 = vld [vmem:[%s2511 + $0x18] sm:$0xff]
    %v2516 = vadd.f32 %v2512, %v2464
    %v2517 = vadd.f32 %v2513, %v2466
    %v2518 = vadd.f32 %v2514, %v2505
    %v2519 = vadd.f32 %v2515, %v2507
    %v2520 = vxor.u32 %v2516, 2147483648
    %v2521 = vmul.f32 %v2520, 1.442695
    %v2522 = vpow.pop %v2521
    %v2523 = vadd.f32 %v2522, 1.0
    %v2524 = vrcp.pop %v2523
    %v2525 = vmul.f32 1.0, %v2524
    %v2526 = vxor.u32 %v2517, 2147483648
    %v2527 = vmul.f32 %v2526, 1.442695
    %v2528 = vpow.pop %v2527
    %v2529 = vadd.f32 %v2528, 1.0
    %v2530 = vrcp.pop %v2529
    %v2531 = vmul.f32 1.0, %v2530
    %v2532 = vtanh.pop %v2518
    %v2533 = vxor.u32 %v2519, 2147483648
    %v2534 = vmul.f32 %v2533, 1.442695
    %v2535 = vpow.pop %v2534
    %v2536 = vadd.f32 %v2535, 1.0
    %v2537 = vrcp.pop %v2536
    %v2538 = vmul.f32 1.0, %v2537
    %v2539 = vld [vmem:[#allocation3] sm:$0xff]
    %v2540 = vmul.f32 %v2531, %v2539
    %v2541 = vmul.f32 %v2525, %v2532
    %v2542 = vadd.f32 %v2540, %v2541
    %v2543 = vtanh.pop %v2542
    %v2544 = vmul.f32 %v2538, %v2543
    %2545 = vst [vmem:[#allocation2] sm:$0xff] %v2544
    %2546 = vst [vmem:[#allocation3] sm:$0xff] %v2542
    // Predicated region
    $region30: #{tpu_custom_call.1} parent=1 // pred_check
      %p2547 = pneg %p46
    $region31: #{tpu_custom_call.1} parent=1 // pred_check_branch
      %2549 = sbr.rel (%p2547) target = $region33
    $region32: #{tpu_custom_call.1} parent=1 // pred_region
      %v2550 = vld [vmem:[#allocation2] sm:$0xff]
      %v2551 = vpack.c.bf16 %v2550, %v2550
      %v2552 = vld [vmem:[%s2] sm:$0xf]
      %v2553 = vld [vmem:[%s2 + $0x4] sm:$0xf]
      %v2554 = vld [vmem:[%s2 + $0x8] sm:$0xf]
      %v2555 = vld [vmem:[%s2 + $0xc] sm:$0xf]
      %v2556 = vld [vmem:[%s2 + $0x10] sm:$0xf]
      %v2557 = vld [vmem:[%s2 + $0x14] sm:$0xf]
      %v2558 = vld [vmem:[%s2 + $0x18] sm:$0xf]
      %v2559 = vld [vmem:[%s2 + $0x1c] sm:$0xf]
      %v2560 = vld [vmem:[%s2 + $0x20] sm:$0xf]
      %v2561 = vld [vmem:[%s2 + $0x24] sm:$0xf]
      %v2562 = vld [vmem:[%s2 + $0x28] sm:$0xf]
      %v2563 = vld [vmem:[%s2 + $0x2c] sm:$0xf]
      %v2564 = vld [vmem:[%s2 + $0x30] sm:$0xf]
      %v2565 = vld [vmem:[%s2 + $0x34] sm:$0xf]
      %v2566 = vld [vmem:[%s2 + $0x38] sm:$0xf]
      %v2567 = vld [vmem:[%s2 + $0x3c] sm:$0xf]
      %v2568 = vld [vmem:[%s3] sm:$0x1]
      %v2570 = vlaneseq
      %v2571 = vshrl.u32 %v2570, 7
      %v2572 = vsub.s32 0, %v2571
      %v2573 = vrot.slane %v2568, %v2572
      %v2591 = vunpack.c.l.b16 %v2552
      %v2592 = vunpack.c.l.b16 %v2553
      %v2593 = vunpack.c.l.b16 %v2554
      %v2594 = vunpack.c.l.b16 %v2555
      %v2595 = vunpack.c.l.b16 %v2556
      %v2596 = vunpack.c.l.b16 %v2557
      %v2597 = vunpack.c.l.b16 %v2558
      %v2598 = vunpack.c.l.b16 %v2559
      %v2599 = vunpack.c.l.b16 %v2560
      %v2600 = vunpack.c.l.b16 %v2561
      %v2601 = vunpack.c.l.b16 %v2562
      %v2602 = vunpack.c.l.b16 %v2563
      %v2603 = vunpack.c.l.b16 %v2564
      %v2604 = vunpack.c.l.b16 %v2565
      %v2605 = vunpack.c.l.b16 %v2566
      %v2606 = vunpack.c.l.b16 %v2567
      %v2607 = vpack.c.b16 %v2592, %v2591
      %v2608 = vpack.c.b16 %v2594, %v2593
      %v2609 = vpack.c.b16 %v2596, %v2595
      %v2610 = vpack.c.b16 %v2598, %v2597
      %v2611 = vpack.c.b16 %v2600, %v2599
      %v2612 = vpack.c.b16 %v2602, %v2601
      %v2613 = vpack.c.b16 %v2604, %v2603
      %v2614 = vpack.c.b16 %v2606, %v2605
      %2623 = vmatprep.subr.bf16.mxu0 0
      %2624 = vmatpush1.bf16.msra.mxu0 %v2607
      %2625 = vmatprep.subr.bf16.mxu0 0
      %2626 = vmatpush1.bf16.msra.mxu0 %v2608
      %2627 = vmatprep.subr.bf16.mxu0 0
      %2628 = vmatpush1.bf16.msra.mxu0 %v2609
      %2629 = vmatprep.subr.bf16.mxu0 0
      %2630 = vmatpush1.bf16.msra.mxu0 %v2610
      %2631 = vmatprep.subr.bf16.mxu0 0
      %2632 = vmatpush1.bf16.msra.mxu0 %v2611
      %2633 = vmatprep.subr.bf16.mxu0 0
      %2634 = vmatpush1.bf16.msra.mxu0 %v2612
      %2635 = vmatprep.subr.bf16.mxu0 0
      %2636 = vmatpush1.bf16.msra.mxu0 %v2613
      %2637 = vmatprep.subr.bf16.mxu0 0
      %2638 = vmatpush1.bf16.msra.mxu0 %v2614
      %2639 = vmatprep.subr.bf16.mxu0 0
      %2640 = vmatpush1.bf16.msra.mxu0 0
      %2641 = vmatprep.subr.bf16.mxu0 0
      %2642 = vmatpush1.bf16.msra.mxu0 0
      %2643 = vmatprep.subr.bf16.mxu0 0
      %2644 = vmatpush1.bf16.msra.mxu0 0
      %2645 = vmatprep.subr.bf16.mxu0 0
      %2646 = vmatpush1.bf16.msra.mxu0 0
      %2647 = vmatprep.subr.bf16.mxu0 0
      %2648 = vmatpush1.bf16.msra.mxu0 0
      %2649 = vmatprep.subr.bf16.mxu0 0
      %2650 = vmatpush1.bf16.msra.mxu0 0
      %2651 = vmatprep.subr.bf16.mxu0 0
      %2652 = vmatpush1.bf16.msra.mxu0 0
      %2653 = vmatprep.subr.bf16.mxu0 0
      %2654 = vmatpush1.bf16.msra.mxu0 0
      %2655 = vmatprep.mubr.bf16.mxu0 0
      %2656 = vmatmul.mubr.bf16.gmra.mrb[0].mxu0 %v2551
      %v2657 = vpop.f32.mrb[0].mxu0
      %v2658 = vadd.f32 %v2573, %v2657
      %v2659 = vpop.f32.mrb[0].mxu0
      %v2660 = vpop.f32.mrb[0].mxu0
      %v2661 = vpop.f32.mrb[0].mxu0
      %2662 = vdwg.mxu0
      %vm2663 = vcmask 31744
      %2664 = vst.msk [vmem:[%s4] sm:$0xff] %vm2663, %v2658
    $region33: #{tpu_custom_call.1} parent=1 // pred_fallthru
      _
    // Predicated region
    $region34: #{tpu_custom_call.1} parent=1 // pred_check
      _
    $region35: #{tpu_custom_call.1} parent=1 // pred_check_branch
      %2666 = sbr.rel (0) target = $region37
    $region36: #{tpu_custom_call.1} parent=1 // pred_region
      _
    $region37: #{tpu_custom_call.1} parent=1 // pred_fallthru
      _
    // Predicated region
    $region38: #{tpu_custom_call.1} parent=1 // pred_check
      _
    $region39: #{tpu_custom_call.1} parent=1 // pred_check_branch
      %2668 = sbr.rel (0) target = $region41
    $region40: #{tpu_custom_call.1} parent=1 // pred_region
      _
    $region41: #{tpu_custom_call.1} parent=1 // pred_fallthru
      _
    %2669 = vsyncpa [#allocation5], 1
    %2670 = vsyncpa [#allocation7], 1

</llo_original>
